<compile_context>
chip_gen: v7x
topology: tpu7x:2x2x1
jax: 0.10.0
libtpu: 0.0.40
codegen_flags: <defaults>
</compile_context>

<pallas_src>
import jax
import jax.numpy as jnp
from jax.experimental import pallas as pl
from jax.experimental.pallas import tpu as pltpu

STATE_DIM = 145
HIDDEN_DIM = 128
ENC_OUT = HIDDEN_DIM // 2        # 64
TEL_OUT = 48
LANE = 128
MLP_TILE_ROWS = 128              # rows per grid step (256 is also fine on v6e/v7x for big batches)
VMEM_LIMIT = 8 * 1024 * 1024


def _round_up(n, m):
    return ((n + m - 1) // m) * m


def _sigmoid(z):
    return 1.0 / (1.0 + jnp.exp(-z))


# -----------------------------------------------------------------------------
# Fused MLP: (x @ W + b -> ReLU) x N layers, one pallas_call, grid over row tiles
# -----------------------------------------------------------------------------
def _make_mlp_kernel(n_layers, bias_offsets, bias_sizes):
    def kernel(*refs):
        x_ref = refs[0]
        w_refs = refs[1:1 + n_layers]
        b_ref = refs[1 + n_layers]
        o_ref = refs[2 + n_layers]

        h = x_ref[...].astype(jnp.float32)
        for li in range(n_layers):
            w = w_refs[li][...]                                  # bf16 (Din, Dout)
            y = jnp.dot(h.astype(w.dtype), w,
                        preferred_element_type=jnp.float32)      # f32 MXU accumulate
            off, size = bias_offsets[li], bias_sizes[li]
            y = y + b_ref[:, off:off + size]                     # (1, Dout) broadcast
            h = jnp.maximum(y, 0.0)                              # ReLU
        o_ref[...] = h.astype(o_ref.dtype)
    return kernel


def fused_mlp(x, weights, bias_packed, logical_out, *, tile_rows=MLP_TILE_ROWS):
    """x: (R, Din) f32 with Din == weights[0].shape[0] (multiple of 128).
    weights: list of bf16 (Din_i, Dout_i) arrays (dims multiples of 128).
    bias_packed: (1, sum(Dout_i)) f32.  Returns (R, logical_out) f32."""
    R, din = x.shape
    n = len(weights)
    out_dims = [int(w.shape[1]) for w in weights]
    offsets = [0]
    for d in out_dims[:-1]:
        offsets.append(offsets[-1] + d)

    r_pad = _round_up(max(R, 1), tile_rows)
    if r_pad != R:
        x = jnp.pad(x, ((0, r_pad - R), (0, 0)))

    kernel = _make_mlp_kernel(n, tuple(offsets), tuple(out_dims))

    in_specs = [pl.BlockSpec((tile_rows, din), lambda i: (i, 0))]
    in_specs += [pl.BlockSpec(w.shape, lambda i: (0, 0)) for w in weights]   # VMEM-resident
    in_specs += [pl.BlockSpec(bias_packed.shape, lambda i: (0, 0))]
    out_spec = pl.BlockSpec((tile_rows, out_dims[-1]), lambda i: (i, 0))

    out = pl.pallas_call(
        kernel,
        grid=(r_pad // tile_rows,),
        in_specs=in_specs,
        out_specs=out_spec,
        out_shape=jax.ShapeDtypeStruct((r_pad, out_dims[-1]), jnp.float32),
        compiler_params=pltpu.CompilerParams(
            dimension_semantics=("parallel",),
            vmem_limit_bytes=VMEM_LIMIT),
    )(x, *weights, bias_packed)
    return out[:R, :logical_out]


# -----------------------------------------------------------------------------
# LSTM: grid over time, h/c carried in VMEM scratch, weights VMEM-resident
# -----------------------------------------------------------------------------
def _lstm_kernel(x_ref, wih_ref, whh_ref, b_ref, o_ref, h_scr, c_scr):
    @pl.when(pl.program_id(0) == 0)
    def _():
        h_scr[...] = jnp.zeros_like(h_scr)
        c_scr[...] = jnp.zeros_like(c_scr)

    x = x_ref[...]          # (B, Din)
    h = h_scr[...]
    c = c_scr[...]

    def gate(g):
        return (jnp.dot(x, wih_ref[g], preferred_element_type=jnp.float32)
                + jnp.dot(h, whh_ref[g], preferred_element_type=jnp.float32)
                + b_ref[g])

    i_g = _sigmoid(gate(0))        # PyTorch gate order: i, f, g, o
    f_g = _sigmoid(gate(1))
    g_g = jnp.tanh(gate(2))
    o_g = _sigmoid(gate(3))

    c_new = f_g * c + i_g * g_g
    h_new = o_g * jnp.tanh(c_new)
    c_scr[...] = c_new
    h_scr[...] = h_new
    o_ref[...] = h_new


def lstm_forward(x_tbh, w_ih, w_hh, bias):
    """x_tbh: (T, B, Din) f32.  Returns (T, B, H) f32 with h0 = c0 = 0."""
    T, B, din = x_tbh.shape
    H = int(w_hh.shape[-1])
    return pl.pallas_call(
        _lstm_kernel,
        grid=(T,),
        in_specs=[pl.BlockSpec((None, B, din), lambda t: (t, 0, 0)),
                  pl.BlockSpec(w_ih.shape, lambda t: (0, 0, 0)),
                  pl.BlockSpec(w_hh.shape, lambda t: (0, 0, 0)),
                  pl.BlockSpec(bias.shape, lambda t: (0, 0, 0))],
        out_specs=pl.BlockSpec((None, B, H), lambda t: (t, 0, 0)),
        out_shape=jax.ShapeDtypeStruct((T, B, H), jnp.float32),
        scratch_shapes=[pltpu.VMEM((B, H), jnp.float32),
                        pltpu.VMEM((B, H), jnp.float32)],
        compiler_params=pltpu.CompilerParams(
            dimension_semantics=("arbitrary",),   # recurrence: sequential over time
            vmem_limit_bytes=VMEM_LIMIT),
    )(x_tbh, w_ih, w_hh, bias)


# -----------------------------------------------------------------------------
# Parameters (PyTorch-style init) and kernel-side packed/padded parameters
# -----------------------------------------------------------------------------
def init_params(key, state_dim=STATE_DIM, hidden_dim=HIDDEN_DIM):
    enc_dims = [state_dim, hidden_dim, 2 * hidden_dim, 2 * hidden_dim,
                hidden_dim, hidden_dim // 2]
    tel_dims = [hidden_dim // 2, hidden_dim, 2 * hidden_dim, hidden_dim, TEL_OUT]
    H = hidden_dim // 2

    def linear(k, fan_in, fan_out):
        kw, kb = jax.random.split(k)
        bound = float(fan_in) ** -0.5
        w = jax.random.uniform(kw, (fan_in, fan_out), jnp.float32, -bound, bound)
        b = jax.random.uniform(kb, (fan_out,), jnp.float32, -bound, bound)
        return w, b

    def mlp(k, dims):
        ws, bs = [], []
        for fi, fo in zip(dims[:-1], dims[1:]):
            k, sub = jax.random.split(k)
            w, b = linear(sub, fi, fo)
            ws.append(w)
            bs.append(b)
        return ws, bs

    key, k_enc, k_tel, k_lstm = jax.random.split(key, 4)
    enc_w, enc_b = mlp(k_enc, enc_dims)
    tel_w, tel_b = mlp(k_tel, tel_dims)

    bound = float(H) ** -0.5
    k1, k2, k3, k4 = jax.random.split(k_lstm, 4)
    w_ih = jax.random.uniform(k1, (4, H, H), jnp.float32, -bound, bound)  # (gate, in, H)
    w_hh = jax.random.uniform(k2, (4, H, H), jnp.float32, -bound, bound)
    b_ih = jax.random.uniform(k3, (4, 1, H), jnp.float32, -bound, bound)
    b_hh = jax.random.uniform(k4, (4, 1, H), jnp.float32, -bound, bound)

    return {"enc": {"w": enc_w, "b": enc_b},
            "tel": {"w": tel_w, "b": tel_b},
            "lstm": {"w_ih": w_ih, "w_hh": w_hh, "b": b_ih + b_hh}}


def prepare_kernel_params(params):
    def pad_w(w):
        din, dout = w.shape
        return jnp.pad(w, ((0, _round_up(din, LANE) - din),
                           (0, _round_up(dout, LANE) - dout))).astype(jnp.bfloat16)

    def pack_b(bs):
        padded = [jnp.pad(b, (0, _round_up(b.shape[0], LANE) - b.shape[0])) for b in bs]
        return jnp.concatenate(padded).reshape(1, -1).astype(jnp.float32)

    return {"enc": {"w": [pad_w(w) for w in params["enc"]["w"]],
                    "b": pack_b(params["enc"]["b"])},
            "tel": {"w": [pad_w(w) for w in params["tel"]["w"]],
                    "b": pack_b(params["tel"]["b"])},
            "lstm": params["lstm"]}


# -----------------------------------------------------------------------------
# Full ToMnet_state_pred forward
# -----------------------------------------------------------------------------
def tomnet_state_pred_forward(state_action, lens, kparams):
    """state_action: list of (T_b, STATE_DIM) f32 arrays; lens: list of python ints.
    Returns (sum(lens) * 16, 3) f32 (matches the PyTorch module's view(N*16, 3))."""
    B = len(state_action)
    t_max = max(lens)

    # 1) Encode every observed timestep of every sequence in ONE pallas_call.
    rows = jnp.concatenate(state_action, axis=0)                       # (N, 145)
    in_pad = int(kparams["enc"]["w"][0].shape[0])                      # 256
    rows = jnp.pad(rows, ((0, 0), (0, in_pad - rows.shape[1])))
    enc = fused_mlp(rows, kparams["enc"]["w"], kparams["enc"]["b"], ENC_OUT)

    # 2) pad_sequence (batch_first): zeros after each sequence end.
    padded = jnp.zeros((B, t_max, ENC_OUT), jnp.float32)
    off = 0
    for b in range(B):
        padded = padded.at[b, :lens[b]].set(enc[off:off + lens[b]])
        off += lens[b]

    # 3) LSTM over time (packed-sequence semantics hold because only t < lens[b]
    #    outputs are consumed and they depend only on valid, left-aligned inputs).
    lstm_out = lstm_forward(jnp.transpose(padded, (1, 0, 2)),
                            kparams["lstm"]["w_ih"], kparams["lstm"]["w_hh"],
                            kparams["lstm"]["b"])
    lstm_out = jnp.transpose(lstm_out, (1, 0, 2))                      # (B, T, 64)

    # 4) pad_packed + per-sample slice + cat  ->  valid rows in batch order.
    valid = jnp.concatenate([lstm_out[b, :lens[b]] for b in range(B)], axis=0)

    # 5) telemetry head (fused 4-layer MLP).
    vin_pad = int(kparams["tel"]["w"][0].shape[0])                     # 128
    valid = jnp.pad(valid, ((0, 0), (0, vin_pad - valid.shape[1])))
    tel = fused_mlp(valid, kparams["tel"]["w"], kparams["tel"]["b"], TEL_OUT)

    # 6) view(N * 16, 3)
    return tel.reshape(tel.shape[0] * 16, 3)


# -----------------------------------------------------------------------------
# Pure-JAX reference (mirrors the kernel numerics: bf16 weights, f32 accumulate)
# -----------------------------------------------------------------------------
def _reference_mlp(x, ws, bs):
    h = x.astype(jnp.float32)
    for w, b in zip(ws, bs):
        y = jnp.dot(h.astype(jnp.bfloat16), w.astype(jnp.bfloat16),
                    preferred_element_type=jnp.float32) + b
        h = jnp.maximum(y, 0.0)
    return h


def _reference_lstm(x_bth, w_ih, w_hh, b):
    B, T, _ = x_bth.shape
    H = w_hh.shape[-1]
    h = jnp.zeros((B, H), jnp.float32)
    c = jnp.zeros((B, H), jnp.float32)
    hp = jax.lax.Precision.HIGHEST
    outs = []
    for t in range(T):
        xt = x_bth[:, t, :]
        z = [jnp.dot(xt, w_ih[g], precision=hp)
             + jnp.dot(h, w_hh[g], precision=hp) + b[g] for g in range(4)]
        i_g, f_g = _sigmoid(z[0]), _sigmoid(z[1])
        g_g, o_g = jnp.tanh(z[2]), _sigmoid(z[3])
        c = f_g * c + i_g * g_g
        h = o_g * jnp.tanh(c)
        outs.append(h)
    return jnp.stack(outs, axis=1)                                     # (B, T, H)


def reference_forward(state_action, lens, params):
    B = len(state_action)
    t_max = max(lens)
    enc = [_reference_mlp(sa, params["enc"]["w"], params["enc"]["b"])
           for sa in state_action]
    padded = jnp.zeros((B, t_max, ENC_OUT), jnp.float32)
    for b in range(B):
        padded = padded.at[b, :lens[b]].set(enc[b])
    out = _reference_lstm(padded, params["lstm"]["w_ih"], params["lstm"]["w_hh"],
                          params["lstm"]["b"])
    valid = jnp.concatenate([out[b, :lens[b]] for b in range(B)], axis=0)
    tel = _reference_mlp(valid, params["tel"]["w"], params["tel"]["b"])
    return tel.reshape(tel.shape[0] * 16, 3)


if __name__ == "__main__":
    key = jax.random.PRNGKey(0)
    key, k_params = jax.random.split(key)
    params = init_params(k_params)
    kparams = prepare_kernel_params(params)

    # batch = 2 variable-length trajectories of 145-dim states (seq lens 8 and 5).
    lens = [8, 5]
    state_action = []
    for L in lens:
        key, kx = jax.random.split(key)
        state_action.append(jax.random.normal(kx, (L, STATE_DIM), jnp.float32))

    out = tomnet_state_pred_forward(state_action, lens, kparams)
    out = jax.block_until_ready(out)

    ref = reference_forward(state_action, lens, params)
    assert out.shape == (sum(lens) * 16, 3), out.shape
    # bf16 weights/activations (per perf review) -> loosened tolerance vs the f32 PyTorch math.
    assert jnp.allclose(out, ref, atol=2e-2, rtol=2e-2), (
        "max abs diff = %f" % float(jnp.max(jnp.abs(out - ref))))

    print("KERNEL_OK")
</pallas_src>

<mosaic_0001>
module attributes {stable_mosaic.version = 11 : i64} {
  func.func @kernel(%arg0: i32, %arg1: memref<128x256xf32, #tpu.memory_space<vmem>>, %arg2: memref<256x128xbf16, #tpu.memory_space<vmem>>, %arg3: memref<128x256xbf16, #tpu.memory_space<vmem>>, %arg4: memref<256x256xbf16, #tpu.memory_space<vmem>>, %arg5: memref<256x128xbf16, #tpu.memory_space<vmem>>, %arg6: memref<128x128xbf16, #tpu.memory_space<vmem>>, %arg7: memref<1x896xf32, #tpu.memory_space<vmem>>, %arg8: memref<128x128xf32, #tpu.memory_space<vmem>>) attributes {dimension_semantics = [#tpu.dimension_semantics<parallel>], iteration_bounds = array<i64: 1>, scalar_prefetch = 0 : i64, scratch_operands = 0 : i64, tpu.core_type = #tpu.core_type<tc>, window_params = [{transform_indices = @transform_0, window_bounds = array<i64: 128, 256>}, {pipeline_mode = #tpu.pipeline_mode<synchronous>, transform_indices = @transform_1, window_bounds = array<i64: 256, 128>}, {pipeline_mode = #tpu.pipeline_mode<synchronous>, transform_indices = @transform_2, window_bounds = array<i64: 128, 256>}, {pipeline_mode = #tpu.pipeline_mode<synchronous>, transform_indices = @transform_3, window_bounds = array<i64: 256, 256>}, {pipeline_mode = #tpu.pipeline_mode<synchronous>, transform_indices = @transform_4, window_bounds = array<i64: 256, 128>}, {pipeline_mode = #tpu.pipeline_mode<synchronous>, transform_indices = @transform_5, window_bounds = array<i64: 128, 128>}, {pipeline_mode = #tpu.pipeline_mode<synchronous>, transform_indices = @transform_6, window_bounds = array<i64: 1, 896>}, {transform_indices = @transform_7, window_bounds = array<i64: 128, 128>}]} {
    %c0 = arith.constant 0 : index
    %c0_0 = arith.constant 0 : index
    %0 = vector.load %arg1[%c0, %c0_0] : memref<128x256xf32, #tpu.memory_space<vmem>>, vector<128x256xf32>
    %c0_1 = arith.constant 0 : index
    %c0_2 = arith.constant 0 : index
    %1 = vector.load %arg2[%c0_1, %c0_2] : memref<256x128xbf16, #tpu.memory_space<vmem>>, vector<256x128xbf16>
    %2 = arith.truncf %0 : vector<128x256xf32> to vector<128x256xbf16>
    %cst = arith.constant dense<0.000000e+00> : vector<128x128xf32>
    %3 = tpu.matmul %2, %1, %cst {dimension_numbers = #tpu.dot_dimension_numbers<[1], [0], [0], [1], [0, 0, 1, 1], [], []>} : vector<128x256xbf16>, vector<256x128xbf16>, vector<128x128xf32> -> vector<128x128xf32>
    %c0_3 = arith.constant 0 : index
    %c0_4 = arith.constant 0 : index
    %4 = vector.load %arg7[%c0_3, %c0_4] : memref<1x896xf32, #tpu.memory_space<vmem>>, vector<1x128xf32>
    %5 = vector.broadcast %4 : vector<1x128xf32> to vector<128x128xf32>
    %6 = arith.addf %3, %5 : vector<128x128xf32>
    %cst_5 = arith.constant 0.000000e+00 : f32
    %7 = vector.broadcast %cst_5 : f32 to vector<128x128xf32>
    %8 = arith.maximumf %6, %7 : vector<128x128xf32>
    %c0_6 = arith.constant 0 : index
    %c0_7 = arith.constant 0 : index
    %9 = vector.load %arg3[%c0_6, %c0_7] : memref<128x256xbf16, #tpu.memory_space<vmem>>, vector<128x256xbf16>
    %10 = arith.truncf %8 : vector<128x128xf32> to vector<128x128xbf16>
    %cst_8 = arith.constant dense<0.000000e+00> : vector<128x256xf32>
    %11 = tpu.matmul %10, %9, %cst_8 {dimension_numbers = #tpu.dot_dimension_numbers<[1], [0], [0], [1], [0, 0, 1, 1], [], []>} : vector<128x128xbf16>, vector<128x256xbf16>, vector<128x256xf32> -> vector<128x256xf32>
    %c0_9 = arith.constant 0 : index
    %c128 = arith.constant 128 : index
    %12 = vector.load %arg7[%c0_9, %c128] : memref<1x896xf32, #tpu.memory_space<vmem>>, vector<1x256xf32>
    %13 = vector.broadcast %12 : vector<1x256xf32> to vector<128x256xf32>
    %14 = arith.addf %11, %13 : vector<128x256xf32>
    %cst_10 = arith.constant 0.000000e+00 : f32
    %15 = vector.broadcast %cst_10 : f32 to vector<128x256xf32>
    %16 = arith.maximumf %14, %15 : vector<128x256xf32>
    %c0_11 = arith.constant 0 : index
    %c0_12 = arith.constant 0 : index
    %17 = vector.load %arg4[%c0_11, %c0_12] : memref<256x256xbf16, #tpu.memory_space<vmem>>, vector<256x256xbf16>
    %18 = arith.truncf %16 : vector<128x256xf32> to vector<128x256xbf16>
    %cst_13 = arith.constant dense<0.000000e+00> : vector<128x256xf32>
    %19 = tpu.matmul %18, %17, %cst_13 {dimension_numbers = #tpu.dot_dimension_numbers<[1], [0], [0], [1], [0, 0, 1, 1], [], []>} : vector<128x256xbf16>, vector<256x256xbf16>, vector<128x256xf32> -> vector<128x256xf32>
    %c0_14 = arith.constant 0 : index
    %c384 = arith.constant 384 : index
    %20 = vector.load %arg7[%c0_14, %c384] : memref<1x896xf32, #tpu.memory_space<vmem>>, vector<1x256xf32>
    %21 = vector.broadcast %20 : vector<1x256xf32> to vector<128x256xf32>
    %22 = arith.addf %19, %21 : vector<128x256xf32>
    %cst_15 = arith.constant 0.000000e+00 : f32
    %23 = vector.broadcast %cst_15 : f32 to vector<128x256xf32>
    %24 = arith.maximumf %22, %23 : vector<128x256xf32>
    %c0_16 = arith.constant 0 : index
    %c0_17 = arith.constant 0 : index
    %25 = vector.load %arg5[%c0_16, %c0_17] : memref<256x128xbf16, #tpu.memory_space<vmem>>, vector<256x128xbf16>
    %26 = arith.truncf %24 : vector<128x256xf32> to vector<128x256xbf16>
    %cst_18 = arith.constant dense<0.000000e+00> : vector<128x128xf32>
    %27 = tpu.matmul %26, %25, %cst_18 {dimension_numbers = #tpu.dot_dimension_numbers<[1], [0], [0], [1], [0, 0, 1, 1], [], []>} : vector<128x256xbf16>, vector<256x128xbf16>, vector<128x128xf32> -> vector<128x128xf32>
    %c0_19 = arith.constant 0 : index
    %c640 = arith.constant 640 : index
    %28 = vector.load %arg7[%c0_19, %c640] : memref<1x896xf32, #tpu.memory_space<vmem>>, vector<1x128xf32>
    %29 = vector.broadcast %28 : vector<1x128xf32> to vector<128x128xf32>
    %30 = arith.addf %27, %29 : vector<128x128xf32>
    %cst_20 = arith.constant 0.000000e+00 : f32
    %31 = vector.broadcast %cst_20 : f32 to vector<128x128xf32>
    %32 = arith.maximumf %30, %31 : vector<128x128xf32>
    %c0_21 = arith.constant 0 : index
    %c0_22 = arith.constant 0 : index
    %33 = vector.load %arg6[%c0_21, %c0_22] : memref<128x128xbf16, #tpu.memory_space<vmem>>, vector<128x128xbf16>
    %34 = arith.truncf %32 : vector<128x128xf32> to vector<128x128xbf16>
    %cst_23 = arith.constant dense<0.000000e+00> : vector<128x128xf32>
    %35 = tpu.matmul %34, %33, %cst_23 {dimension_numbers = #tpu.dot_dimension_numbers<[1], [0], [0], [1], [0, 0, 1, 1], [], []>} : vector<128x128xbf16>, vector<128x128xbf16>, vector<128x128xf32> -> vector<128x128xf32>
    %c0_24 = arith.constant 0 : index
    %c768 = arith.constant 768 : index
    %36 = vector.load %arg7[%c0_24, %c768] : memref<1x896xf32, #tpu.memory_space<vmem>>, vector<1x128xf32>
    %37 = vector.broadcast %36 : vector<1x128xf32> to vector<128x128xf32>
    %38 = arith.addf %35, %37 : vector<128x128xf32>
    %cst_25 = arith.constant 0.000000e+00 : f32
    %39 = vector.broadcast %cst_25 : f32 to vector<128x128xf32>
    %40 = arith.maximumf %38, %39 : vector<128x128xf32>
    %c0_26 = arith.constant 0 : index
    %c0_27 = arith.constant 0 : index
    %41 = vector.load %arg8[%c0_26, %c0_27] : memref<128x128xf32, #tpu.memory_space<vmem>>, vector<128x128xf32>
    tpu.vector_store %arg8[%c0_26, %c0_27], %40 {strides = array<i32>} : memref<128x128xf32, #tpu.memory_space<vmem>>, vector<128x128xf32>,
    return
  }
  func.func @transform_0(%arg0: i32) -> (i32, i32) {
    %c0_i32 = arith.constant 0 : i32
    %c0_i32_0 = arith.constant 0 : i32
    return %arg0, %c0_i32 : i32, i32
  }
  func.func @transform_1(%arg0: i32) -> (i32, i32) {
    %c0_i32 = arith.constant 0 : i32
    %c0_i32_0 = arith.constant 0 : i32
    %c0_i32_1 = arith.constant 0 : i32
    return %c0_i32, %c0_i32_0 : i32, i32
  }
  func.func @transform_2(%arg0: i32) -> (i32, i32) {
    %c0_i32 = arith.constant 0 : i32
    %c0_i32_0 = arith.constant 0 : i32
    %c0_i32_1 = arith.constant 0 : i32
    return %c0_i32, %c0_i32_0 : i32, i32
  }
  func.func @transform_3(%arg0: i32) -> (i32, i32) {
    %c0_i32 = arith.constant 0 : i32
    %c0_i32_0 = arith.constant 0 : i32
    %c0_i32_1 = arith.constant 0 : i32
    return %c0_i32, %c0_i32_0 : i32, i32
  }
  func.func @transform_4(%arg0: i32) -> (i32, i32) {
    %c0_i32 = arith.constant 0 : i32
    %c0_i32_0 = arith.constant 0 : i32
    %c0_i32_1 = arith.constant 0 : i32
    return %c0_i32, %c0_i32_0 : i32, i32
  }
  func.func @transform_5(%arg0: i32) -> (i32, i32) {
    %c0_i32 = arith.constant 0 : i32
    %c0_i32_0 = arith.constant 0 : i32
    %c0_i32_1 = arith.constant 0 : i32
    return %c0_i32, %c0_i32_0 : i32, i32
  }
  func.func @transform_6(%arg0: i32) -> (i32, i32) {
    %c0_i32 = arith.constant 0 : i32
    %c0_i32_0 = arith.constant 0 : i32
    %c0_i32_1 = arith.constant 0 : i32
    return %c0_i32, %c0_i32_0 : i32, i32
  }
  func.func @transform_7(%arg0: i32) -> (i32, i32) {
    %c0_i32 = arith.constant 0 : i32
    %c0_i32_0 = arith.constant 0 : i32
    return %arg0, %c0_i32 : i32, i32
  }
}

</mosaic_0001>

<llo_original>
// kernel: tpu_custom_call.1
$region0: #{tpu_custom_call.1}
  #allocation0 [shape = 'u32[]', space=smem, size = 0x4, offset = 0x4, fixed_abs, tag = 'smem constant byte address 0x4 - core index']
  #allocation1 [shape = 'u32[144,128]{1,0:T(1,128)}', space=vmem, size = 0x12000, scoped, tag = 'internal scratch']
  %s0 = inlined_call_operand.hbm [shape: f32[128,256], index: 0, kind: input, shape index: {}]
  %s1 = inlined_call_operand.hbm [shape: bf16[256,128], index: 1, kind: input, shape index: {}]
  %s2 = inlined_call_operand.hbm [shape: bf16[128,256], index: 2, kind: input, shape index: {}]
  %s3 = inlined_call_operand.hbm [shape: bf16[256,256], index: 3, kind: input, shape index: {}]
  %s4 = inlined_call_operand.hbm [shape: bf16[256,128], index: 4, kind: input, shape index: {}]
  %s5 = inlined_call_operand.hbm [shape: bf16[128,128], index: 5, kind: input, shape index: {}]
  %s6 = inlined_call_operand.vmem [shape: f32[1,896], index: 6, kind: input, shape index: {}]
  %s7 = inlined_call_operand.hbm [shape: f32[128,128], index: 7, kind: output, shape index: {}]
  %s8 = sld [smem:[#allocation0]]
  $region62: #{tpu_custom_call.1} parent=0
    _
  %s10 = ssub.s32 1, %s8
  %s11 = scalar_select 0, %s10, %s8
  $region1: #{tpu_custom_call.1} parent=0
    #allocation2 [shape = 'u8[131072]{0}', space=vmem, size = 0x20000, scoped, tag = 'input window, operand 0, single buffered']
    #allocation3 [shape = 's32[1]{0}', space=sflag, size = 0x4, scoped, tag = 'scoped memory for tpu_custom_call.1']
    #allocation4 [shape = 's32[1]{0}', space=sflag, size = 0x4, scoped, tag = 'scoped memory for tpu_custom_call.1']
    #allocation5 [shape = 'u8[65536]{0}', space=vmem, size = 0x10000, scoped, tag = 'input window, operand 1, single buffered']
    #allocation6 [shape = 's32[1]{0}', space=sflag, size = 0x4, scoped, tag = 'scoped memory for tpu_custom_call.1']
    #allocation7 [shape = 'u8[65536]{0}', space=vmem, size = 0x10000, scoped, tag = 'input window, operand 2, single buffered']
    #allocation8 [shape = 'u8[131072]{0}', space=vmem, size = 0x20000, scoped, tag = 'input window, operand 3, single buffered']
    #allocation9 [shape = 's32[1]{0}', space=sflag, size = 0x4, scoped, tag = 'scoped memory for tpu_custom_call.1']
    #allocation10 [shape = 'u8[65536]{0}', space=vmem, size = 0x10000, scoped, tag = 'input window, operand 4, single buffered']
    #allocation11 [shape = 'u8[32768]{0}', space=vmem, size = 0x8000, scoped, tag = 'input window, operand 5, single buffered']
    #allocation12 [shape = 's32[1]{0}', space=sflag, size = 0x4, scoped, tag = 'scoped memory for tpu_custom_call.1']
    #allocation13 [shape = 'u8[65536]{0}', space=vmem, size = 0x10000, scoped, tag = 'output window, operand 0, single buffered']
    %12 = vsyncpa [#allocation3], 0
    %13 = vsyncpa [#allocation6], 0
    %14 = vsyncpa [#allocation9], 0
    %15 = vsyncpa [#allocation12], 0
    %16 = vsyncpa [#allocation4], 0
    // Predicated region
    $region2: #{tpu_custom_call.1} parent=1 // pred_check
      _
    $region3: #{tpu_custom_call.1} parent=1 // pred_check_branch
      %18 = sbr.rel (0) target = $region5
    $region4: #{tpu_custom_call.1} parent=1 // pred_region
      %s20 = ssub.s32 4096, 4096
      %21 = vsyncadd [#allocation3], %s20
      %s22 = sshll.u32 [#allocation2], 4
      %s23 = int_to_ptr.vmem [resolvable:$true] %s22
      %28 = dma.hbm_to_vmem [thread:$0]  %s0, 4096, %s23, [#allocation3], 256, 256, 16
    $region5: #{tpu_custom_call.1} parent=1 // pred_fallthru
      _
    // Predicated region
    $region6: #{tpu_custom_call.1} parent=1 // pred_check
      _
    $region7: #{tpu_custom_call.1} parent=1 // pred_check_branch
      %30 = sbr.rel (0) target = $region9
    $region8: #{tpu_custom_call.1} parent=1 // pred_region
      %s32 = ssub.s32 2048, 2048
      %33 = vsyncadd [#allocation6], %s32
      %s34 = sshll.u32 [#allocation5], 4
      %s35 = int_to_ptr.vmem [resolvable:$true] %s34
      %40 = dma.hbm_to_vmem [thread:$0]  %s1, 2048, %s35, [#allocation6], 64, 64, 4
    $region9: #{tpu_custom_call.1} parent=1 // pred_fallthru
      _
    // Predicated region
    $region10: #{tpu_custom_call.1} parent=1 // pred_check
      _
    $region11: #{tpu_custom_call.1} parent=1 // pred_check_branch
      %42 = sbr.rel (0) target = $region13
    $region12: #{tpu_custom_call.1} parent=1 // pred_region
      %s44 = ssub.s32 2048, 2048
      %45 = vsyncadd [#allocation6], %s44
      %s46 = sshll.u32 [#allocation7], 4
      %s47 = int_to_ptr.vmem [resolvable:$true] %s46
      %52 = dma.hbm_to_vmem [thread:$0]  %s2, 2048, %s47, [#allocation6], 128, 128, 8
    $region13: #{tpu_custom_call.1} parent=1 // pred_fallthru
      _
    // Predicated region
    $region14: #{tpu_custom_call.1} parent=1 // pred_check
      _
    $region15: #{tpu_custom_call.1} parent=1 // pred_check_branch
      %54 = sbr.rel (0) target = $region17
    $region16: #{tpu_custom_call.1} parent=1 // pred_region
      %s56 = ssub.s32 4096, 4096
      %57 = vsyncadd [#allocation9], %s56
      %s58 = sshll.u32 [#allocation8], 4
      %s59 = int_to_ptr.vmem [resolvable:$true] %s58
      %64 = dma.hbm_to_vmem [thread:$0]  %s3, 4096, %s59, [#allocation9], 128, 128, 8
    $region17: #{tpu_custom_call.1} parent=1 // pred_fallthru
      _
    // Predicated region
    $region18: #{tpu_custom_call.1} parent=1 // pred_check
      _
    $region19: #{tpu_custom_call.1} parent=1 // pred_check_branch
      %66 = sbr.rel (0) target = $region21
    $region20: #{tpu_custom_call.1} parent=1 // pred_region
      %s68 = ssub.s32 2048, 2048
      %69 = vsyncadd [#allocation9], %s68
      %s70 = sshll.u32 [#allocation10], 4
      %s71 = int_to_ptr.vmem [resolvable:$true] %s70
      %76 = dma.hbm_to_vmem [thread:$0]  %s4, 2048, %s71, [#allocation9], 64, 64, 4
    $region21: #{tpu_custom_call.1} parent=1 // pred_fallthru
      _
    // Predicated region
    $region22: #{tpu_custom_call.1} parent=1 // pred_check
      _
    $region23: #{tpu_custom_call.1} parent=1 // pred_check_branch
      %78 = sbr.rel (0) target = $region25
    $region24: #{tpu_custom_call.1} parent=1 // pred_region
      %s80 = ssub.s32 1024, 1024
      %81 = vsyncadd [#allocation12], %s80
      %s82 = sshll.u32 [#allocation11], 4
      %s83 = int_to_ptr.vmem [resolvable:$true] %s82
      %88 = dma.hbm_to_vmem [thread:$0]  %s5, 1024, %s83, [#allocation12], 64, 64, 4
    $region25: #{tpu_custom_call.1} parent=1 // pred_fallthru
      _
    // Predicated region
    $region26: #{tpu_custom_call.1} parent=1 // pred_check
      _
    $region27: #{tpu_custom_call.1} parent=1 // pred_check_branch
      %90 = sbr.rel (0) target = $region29
    $region28: #{tpu_custom_call.1} parent=1 // pred_region
      _
    $region29: #{tpu_custom_call.1} parent=1 // pred_fallthru
      _
    // Predicated region
    $region30: #{tpu_custom_call.1} parent=1 // pred_check
      _
    $region31: #{tpu_custom_call.1} parent=1 // pred_check_branch
      %92 = sbr.rel (0) target = $region33
    $region32: #{tpu_custom_call.1} parent=1 // pred_region
      %93 = dma.done [#allocation3], 4096
    $region33: #{tpu_custom_call.1} parent=1 // pred_fallthru
      _
    // Predicated region
    $region34: #{tpu_custom_call.1} parent=1 // pred_check
      _
    $region35: #{tpu_custom_call.1} parent=1 // pred_check_branch
      %95 = sbr.rel (0) target = $region37
    $region36: #{tpu_custom_call.1} parent=1 // pred_region
      %96 = dma.done [#allocation6], 2048
    $region37: #{tpu_custom_call.1} parent=1 // pred_fallthru
      _
    // Predicated region
    $region38: #{tpu_custom_call.1} parent=1 // pred_check
      _
    $region39: #{tpu_custom_call.1} parent=1 // pred_check_branch
      %98 = sbr.rel (0) target = $region41
    $region40: #{tpu_custom_call.1} parent=1 // pred_region
      %99 = dma.done [#allocation6], 2048
    $region41: #{tpu_custom_call.1} parent=1 // pred_fallthru
      _
    // Predicated region
    $region42: #{tpu_custom_call.1} parent=1 // pred_check
      _
    $region43: #{tpu_custom_call.1} parent=1 // pred_check_branch
      %101 = sbr.rel (0) target = $region45
    $region44: #{tpu_custom_call.1} parent=1 // pred_region
      %102 = dma.done [#allocation9], 4096
    $region45: #{tpu_custom_call.1} parent=1 // pred_fallthru
      _
    // Predicated region
    $region46: #{tpu_custom_call.1} parent=1 // pred_check
      _
    $region47: #{tpu_custom_call.1} parent=1 // pred_check_branch
      %104 = sbr.rel (0) target = $region49
    $region48: #{tpu_custom_call.1} parent=1 // pred_region
      %105 = dma.done [#allocation9], 2048
    $region49: #{tpu_custom_call.1} parent=1 // pred_fallthru
      _
    // Predicated region
    $region50: #{tpu_custom_call.1} parent=1 // pred_check
      _
    $region51: #{tpu_custom_call.1} parent=1 // pred_check_branch
      %107 = sbr.rel (0) target = $region53
    $region52: #{tpu_custom_call.1} parent=1 // pred_region
      %108 = dma.done [#allocation12], 1024
    $region53: #{tpu_custom_call.1} parent=1 // pred_fallthru
      _
    %v110 = vld [vmem:[#allocation2] sm:$0xff]
    %v111 = vld [vmem:[#allocation2 + $0x8] sm:$0xff]
    %v112 = vld [vmem:[#allocation2 + $0x10] sm:$0xff]
    %v113 = vld [vmem:[#allocation2 + $0x18] sm:$0xff]
    %v114 = vld [vmem:[#allocation2 + $0x20] sm:$0xff]
    %v115 = vld [vmem:[#allocation2 + $0x28] sm:$0xff]
    %v116 = vld [vmem:[#allocation2 + $0x30] sm:$0xff]
    %v117 = vld [vmem:[#allocation2 + $0x38] sm:$0xff]
    %v118 = vld [vmem:[#allocation2 + $0x40] sm:$0xff]
    %v119 = vld [vmem:[#allocation2 + $0x48] sm:$0xff]
    %v120 = vld [vmem:[#allocation2 + $0x50] sm:$0xff]
    %v121 = vld [vmem:[#allocation2 + $0x58] sm:$0xff]
    %v122 = vld [vmem:[#allocation2 + $0x60] sm:$0xff]
    %v123 = vld [vmem:[#allocation2 + $0x68] sm:$0xff]
    %v124 = vld [vmem:[#allocation2 + $0x70] sm:$0xff]
    %v125 = vld [vmem:[#allocation2 + $0x78] sm:$0xff]
    %v126 = vld [vmem:[#allocation2 + $0x80] sm:$0xff]
    %v127 = vld [vmem:[#allocation2 + $0x88] sm:$0xff]
    %v128 = vld [vmem:[#allocation2 + $0x90] sm:$0xff]
    %v129 = vld [vmem:[#allocation2 + $0x98] sm:$0xff]
    %v130 = vld [vmem:[#allocation2 + $0xa0] sm:$0xff]
    %v131 = vld [vmem:[#allocation2 + $0xa8] sm:$0xff]
    %v132 = vld [vmem:[#allocation2 + $0xb0] sm:$0xff]
    %v133 = vld [vmem:[#allocation2 + $0xb8] sm:$0xff]
    %v134 = vld [vmem:[#allocation2 + $0xc0] sm:$0xff]
    %v135 = vld [vmem:[#allocation2 + $0xc8] sm:$0xff]
    %v136 = vld [vmem:[#allocation2 + $0xd0] sm:$0xff]
    %v137 = vld [vmem:[#allocation2 + $0xd8] sm:$0xff]
    %v138 = vld [vmem:[#allocation2 + $0xe0] sm:$0xff]
    %v139 = vld [vmem:[#allocation2 + $0xe8] sm:$0xff]
    %v140 = vld [vmem:[#allocation2 + $0xf0] sm:$0xff]
    %v141 = vld [vmem:[#allocation2 + $0xf8] sm:$0xff]
    %v142 = vld [vmem:[#allocation5] sm:$0xf]
    %v143 = vld [vmem:[#allocation5 + $0x4] sm:$0xf]
    %v144 = vld [vmem:[#allocation5 + $0x8] sm:$0xf]
    %v145 = vld [vmem:[#allocation5 + $0xc] sm:$0xf]
    %v146 = vld [vmem:[#allocation5 + $0x10] sm:$0xf]
    %v147 = vld [vmem:[#allocation5 + $0x14] sm:$0xf]
    %v148 = vld [vmem:[#allocation5 + $0x18] sm:$0xf]
    %v149 = vld [vmem:[#allocation5 + $0x1c] sm:$0xf]
    %v150 = vld [vmem:[#allocation5 + $0x20] sm:$0xf]
    %v151 = vld [vmem:[#allocation5 + $0x24] sm:$0xf]
    %v152 = vld [vmem:[#allocation5 + $0x28] sm:$0xf]
    %v153 = vld [vmem:[#allocation5 + $0x2c] sm:$0xf]
    %v154 = vld [vmem:[#allocation5 + $0x30] sm:$0xf]
    %v155 = vld [vmem:[#allocation5 + $0x34] sm:$0xf]
    %v156 = vld [vmem:[#allocation5 + $0x38] sm:$0xf]
    %v157 = vld [vmem:[#allocation5 + $0x3c] sm:$0xf]
    %v158 = vld [vmem:[#allocation5 + $0x40] sm:$0xf]
    %v159 = vld [vmem:[#allocation5 + $0x44] sm:$0xf]
    %v160 = vld [vmem:[#allocation5 + $0x48] sm:$0xf]
    %v161 = vld [vmem:[#allocation5 + $0x4c] sm:$0xf]
    %v162 = vld [vmem:[#allocation5 + $0x50] sm:$0xf]
    %v163 = vld [vmem:[#allocation5 + $0x54] sm:$0xf]
    %v164 = vld [vmem:[#allocation5 + $0x58] sm:$0xf]
    %v165 = vld [vmem:[#allocation5 + $0x5c] sm:$0xf]
    %v166 = vld [vmem:[#allocation5 + $0x60] sm:$0xf]
    %v167 = vld [vmem:[#allocation5 + $0x64] sm:$0xf]
    %v168 = vld [vmem:[#allocation5 + $0x68] sm:$0xf]
    %v169 = vld [vmem:[#allocation5 + $0x6c] sm:$0xf]
    %v170 = vld [vmem:[#allocation5 + $0x70] sm:$0xf]
    %v171 = vld [vmem:[#allocation5 + $0x74] sm:$0xf]
    %v172 = vld [vmem:[#allocation5 + $0x78] sm:$0xf]
    %v173 = vld [vmem:[#allocation5 + $0x7c] sm:$0xf]
    %v174 = vpack.c.bf16 %v112, %v110
    %v175 = vpack.c.bf16 %v113, %v111
    %v176 = vpack.c.bf16 %v116, %v114
    %v177 = vpack.c.bf16 %v117, %v115
    %v178 = vpack.c.bf16 %v120, %v118
    %v179 = vpack.c.bf16 %v121, %v119
    %v180 = vpack.c.bf16 %v124, %v122
    %v181 = vpack.c.bf16 %v125, %v123
    %v182 = vpack.c.bf16 %v128, %v126
    %v183 = vpack.c.bf16 %v129, %v127
    %v184 = vpack.c.bf16 %v132, %v130
    %v185 = vpack.c.bf16 %v133, %v131
    %v186 = vpack.c.bf16 %v136, %v134
    %v187 = vpack.c.bf16 %v137, %v135
    %v188 = vpack.c.bf16 %v140, %v138
    %v189 = vpack.c.bf16 %v141, %v139
    %v190 = vld [vmem:[%s6] sm:$0x1]
    %v192 = vlaneseq
    %v193 = vshrl.u32 %v192, 7
    %v194 = vsub.s32 0, %v193
    %v195 = vrot.slane %v190, %v194
    %v229 = vunpack.c.l.b16 %v142
    %v230 = vunpack.c.l.b16 %v143
    %v231 = vunpack.c.l.b16 %v144
    %v232 = vunpack.c.l.b16 %v145
    %v233 = vunpack.c.l.b16 %v146
    %v234 = vunpack.c.l.b16 %v147
    %v235 = vunpack.c.l.b16 %v148
    %v236 = vunpack.c.l.b16 %v149
    %v237 = vunpack.c.l.b16 %v150
    %v238 = vunpack.c.l.b16 %v151
    %v239 = vunpack.c.l.b16 %v152
    %v240 = vunpack.c.l.b16 %v153
    %v241 = vunpack.c.l.b16 %v154
    %v242 = vunpack.c.l.b16 %v155
    %v243 = vunpack.c.l.b16 %v156
    %v244 = vunpack.c.l.b16 %v157
    %v245 = vunpack.c.l.b16 %v158
    %v246 = vunpack.c.l.b16 %v159
    %v247 = vunpack.c.l.b16 %v160
    %v248 = vunpack.c.l.b16 %v161
    %v249 = vunpack.c.l.b16 %v162
    %v250 = vunpack.c.l.b16 %v163
    %v251 = vunpack.c.l.b16 %v164
    %v252 = vunpack.c.l.b16 %v165
    %v253 = vunpack.c.l.b16 %v166
    %v254 = vunpack.c.l.b16 %v167
    %v255 = vunpack.c.l.b16 %v168
    %v256 = vunpack.c.l.b16 %v169
    %v257 = vunpack.c.l.b16 %v170
    %v258 = vunpack.c.l.b16 %v171
    %v259 = vunpack.c.l.b16 %v172
    %v260 = vunpack.c.l.b16 %v173
    %v261 = vpack.c.b16 %v230, %v229
    %v262 = vpack.c.b16 %v232, %v231
    %v263 = vpack.c.b16 %v234, %v233
    %v264 = vpack.c.b16 %v236, %v235
    %v265 = vpack.c.b16 %v238, %v237
    %v266 = vpack.c.b16 %v240, %v239
    %v267 = vpack.c.b16 %v242, %v241
    %v268 = vpack.c.b16 %v244, %v243
    %v269 = vpack.c.b16 %v246, %v245
    %v270 = vpack.c.b16 %v248, %v247
    %v271 = vpack.c.b16 %v250, %v249
    %v272 = vpack.c.b16 %v252, %v251
    %v273 = vpack.c.b16 %v254, %v253
    %v274 = vpack.c.b16 %v256, %v255
    %v275 = vpack.c.b16 %v258, %v257
    %v276 = vpack.c.b16 %v260, %v259
    %293 = vmatprep.subr.bf16.mxu0 0
    %294 = vmatpush1.bf16.msra.mxu0 %v261
    %295 = vmatprep.subr.bf16.mxu0 0
    %296 = vmatpush1.bf16.msra.mxu0 %v262
    %297 = vmatprep.subr.bf16.mxu0 0
    %298 = vmatpush1.bf16.msra.mxu0 %v263
    %299 = vmatprep.subr.bf16.mxu0 0
    %300 = vmatpush1.bf16.msra.mxu0 %v264
    %301 = vmatprep.subr.bf16.mxu0 0
    %302 = vmatpush1.bf16.msra.mxu0 %v265
    %303 = vmatprep.subr.bf16.mxu0 0
    %304 = vmatpush1.bf16.msra.mxu0 %v266
    %305 = vmatprep.subr.bf16.mxu0 0
    %306 = vmatpush1.bf16.msra.mxu0 %v267
    %307 = vmatprep.subr.bf16.mxu0 0
    %308 = vmatpush1.bf16.msra.mxu0 %v268
    %309 = vmatprep.subr.bf16.mxu0 0
    %310 = vmatpush1.bf16.msra.mxu0 %v269
    %311 = vmatprep.subr.bf16.mxu0 0
    %312 = vmatpush1.bf16.msra.mxu0 %v270
    %313 = vmatprep.subr.bf16.mxu0 0
    %314 = vmatpush1.bf16.msra.mxu0 %v271
    %315 = vmatprep.subr.bf16.mxu0 0
    %316 = vmatpush1.bf16.msra.mxu0 %v272
    %317 = vmatprep.subr.bf16.mxu0 0
    %318 = vmatpush1.bf16.msra.mxu0 %v273
    %319 = vmatprep.subr.bf16.mxu0 0
    %320 = vmatpush1.bf16.msra.mxu0 %v274
    %321 = vmatprep.subr.bf16.mxu0 0
    %322 = vmatpush1.bf16.msra.mxu0 %v275
    %323 = vmatprep.subr.bf16.mxu0 0
    %324 = vmatpush1.bf16.msra.mxu0 %v276
    %325 = vmatprep.mubr.bf16.mxu0 %v175
    %326 = vmatmul.mubr.bf16.gmra.mrb[0].mxu0 %v174
    %v327 = vpop.f32.mrb[0].mxu0
    %v328 = vadd.f32 %v195, %v327
    %v329 = vpop.f32.mrb[0].mxu0
    %v330 = vpop.f32.mrb[0].mxu0
    %v331 = vadd.f32 %v195, %v330
    %v332 = vpop.f32.mrb[0].mxu0
    %333 = vmatprep.mubr.bf16.mxu0 %v177
    %334 = vmatmul.mubr.bf16.gmra.mrb[0].mxu0 %v176
    %v335 = vpop.f32.mrb[0].mxu0
    %v336 = vadd.f32 %v195, %v335
    %v337 = vpop.f32.mrb[0].mxu0
    %v338 = vpop.f32.mrb[0].mxu0
    %v339 = vadd.f32 %v195, %v338
    %v340 = vpop.f32.mrb[0].mxu0
    %341 = vmatprep.mubr.bf16.mxu0 %v179
    %342 = vmatmul.mubr.bf16.gmra.mrb[0].mxu0 %v178
    %v343 = vpop.f32.mrb[0].mxu0
    %v344 = vadd.f32 %v195, %v343
    %v345 = vpop.f32.mrb[0].mxu0
    %v346 = vpop.f32.mrb[0].mxu0
    %v347 = vadd.f32 %v195, %v346
    %v348 = vpop.f32.mrb[0].mxu0
    %349 = vmatprep.mubr.bf16.mxu0 %v181
    %350 = vmatmul.mubr.bf16.gmra.mrb[0].mxu0 %v180
    %v351 = vpop.f32.mrb[0].mxu0
    %v352 = vadd.f32 %v195, %v351
    %v353 = vpop.f32.mrb[0].mxu0
    %v354 = vpop.f32.mrb[0].mxu0
    %v355 = vadd.f32 %v195, %v354
    %v356 = vpop.f32.mrb[0].mxu0
    %357 = vmatprep.mubr.bf16.mxu0 %v183
    %358 = vmatmul.mubr.bf16.gmra.mrb[0].mxu0 %v182
    %v359 = vpop.f32.mrb[0].mxu0
    %v360 = vadd.f32 %v195, %v359
    %v361 = vpop.f32.mrb[0].mxu0
    %v362 = vpop.f32.mrb[0].mxu0
    %v363 = vadd.f32 %v195, %v362
    %v364 = vpop.f32.mrb[0].mxu0
    %365 = vmatprep.mubr.bf16.mxu0 %v185
    %366 = vmatmul.mubr.bf16.gmra.mrb[0].mxu0 %v184
    %v367 = vpop.f32.mrb[0].mxu0
    %v368 = vadd.f32 %v195, %v367
    %v369 = vpop.f32.mrb[0].mxu0
    %v370 = vpop.f32.mrb[0].mxu0
    %v371 = vadd.f32 %v195, %v370
    %v372 = vpop.f32.mrb[0].mxu0
    %373 = vmatprep.mubr.bf16.mxu0 %v187
    %374 = vmatmul.mubr.bf16.gmra.mrb[0].mxu0 %v186
    %v375 = vpop.f32.mrb[0].mxu0
    %v376 = vadd.f32 %v195, %v375
    %v377 = vpop.f32.mrb[0].mxu0
    %v378 = vpop.f32.mrb[0].mxu0
    %v379 = vadd.f32 %v195, %v378
    %v380 = vpop.f32.mrb[0].mxu0
    %381 = vmatprep.mubr.bf16.mxu0 %v189
    %382 = vmatmul.mubr.bf16.gmra.mrb[0].mxu0 %v188
    %v383 = vpop.f32.mrb[0].mxu0
    %v384 = vadd.f32 %v195, %v383
    %v385 = vpop.f32.mrb[0].mxu0
    %v386 = vpop.f32.mrb[0].mxu0
    %v387 = vadd.f32 %v195, %v386
    %v388 = vpop.f32.mrb[0].mxu0
    %389 = vdwg.mxu0
    %v390 = vmax.f32 %v328, 0.0
    %v391 = vmax.f32 %v331, 0.0
    %v392 = vmax.f32 %v336, 0.0
    %v393 = vmax.f32 %v339, 0.0
    %v394 = vmax.f32 %v344, 0.0
    %v395 = vmax.f32 %v347, 0.0
    %v396 = vmax.f32 %v352, 0.0
    %v397 = vmax.f32 %v355, 0.0
    %v398 = vmax.f32 %v360, 0.0
    %v399 = vmax.f32 %v363, 0.0
    %v400 = vmax.f32 %v368, 0.0
    %v401 = vmax.f32 %v371, 0.0
    %v402 = vmax.f32 %v376, 0.0
    %v403 = vmax.f32 %v379, 0.0
    %v404 = vmax.f32 %v384, 0.0
    %v405 = vmax.f32 %v387, 0.0
    %v406 = vld [vmem:[#allocation7] sm:$0xff]
    %v407 = vld [vmem:[#allocation7 + $0x8] sm:$0xff]
    %v408 = vld [vmem:[#allocation7 + $0x10] sm:$0xff]
    %v409 = vld [vmem:[#allocation7 + $0x18] sm:$0xff]
    %v410 = vld [vmem:[#allocation7 + $0x20] sm:$0xff]
    %v411 = vld [vmem:[#allocation7 + $0x28] sm:$0xff]
    %v412 = vld [vmem:[#allocation7 + $0x30] sm:$0xff]
    %v413 = vld [vmem:[#allocation7 + $0x38] sm:$0xff]
    %v414 = vld [vmem:[#allocation7 + $0x40] sm:$0xff]
    %v415 = vld [vmem:[#allocation7 + $0x48] sm:$0xff]
    %v416 = vld [vmem:[#allocation7 + $0x50] sm:$0xff]
    %v417 = vld [vmem:[#allocation7 + $0x58] sm:$0xff]
    %v418 = vld [vmem:[#allocation7 + $0x60] sm:$0xff]
    %v419 = vld [vmem:[#allocation7 + $0x68] sm:$0xff]
    %v420 = vld [vmem:[#allocation7 + $0x70] sm:$0xff]
    %v421 = vld [vmem:[#allocation7 + $0x78] sm:$0xff]
    %v422 = vpack.c.bf16 %v391, %v390
    %v423 = vpack.c.bf16 %v393, %v392
    %v424 = vpack.c.bf16 %v395, %v394
    %v425 = vpack.c.bf16 %v397, %v396
    %v426 = vpack.c.bf16 %v399, %v398
    %v427 = vpack.c.bf16 %v401, %v400
    %v428 = vpack.c.bf16 %v403, %v402
    %v429 = vpack.c.bf16 %v405, %v404
    %v430 = vld [vmem:[%s6 + $0x1] sm:$0x3]
    %v432 = vlaneseq
    %v433 = vshrl.u32 %v432, 7
    %v434 = vsub.s32 0, %v433
    %v435 = vrot.slane %v430, %v434
    %v436 = vlaneseq
    %v437 = vshrl.u32 %v436, 7
    %v438 = vsub.s32 1, %v437
    %v439 = vrot.slane %v430, %v438
    %v458 = vunpack.c.l.b16 %v406
    %v459 = vunpack.c.h.b16 %v406
    %v460 = vunpack.c.l.b16 %v407
    %v461 = vunpack.c.h.b16 %v407
    %v462 = vunpack.c.l.b16 %v408
    %v463 = vunpack.c.h.b16 %v408
    %v464 = vunpack.c.l.b16 %v409
    %v465 = vunpack.c.h.b16 %v409
    %v466 = vunpack.c.l.b16 %v410
    %v467 = vunpack.c.h.b16 %v410
    %v468 = vunpack.c.l.b16 %v411
    %v469 = vunpack.c.h.b16 %v411
    %v470 = vunpack.c.l.b16 %v412
    %v471 = vunpack.c.h.b16 %v412
    %v472 = vunpack.c.l.b16 %v413
    %v473 = vunpack.c.h.b16 %v413
    %v474 = vunpack.c.l.b16 %v414
    %v475 = vunpack.c.h.b16 %v414
    %v476 = vunpack.c.l.b16 %v415
    %v477 = vunpack.c.h.b16 %v415
    %v478 = vunpack.c.l.b16 %v416
    %v479 = vunpack.c.h.b16 %v416
    %v480 = vunpack.c.l.b16 %v417
    %v481 = vunpack.c.h.b16 %v417
    %v482 = vunpack.c.l.b16 %v418
    %v483 = vunpack.c.h.b16 %v418
    %v484 = vunpack.c.l.b16 %v419
    %v485 = vunpack.c.h.b16 %v419
    %v486 = vunpack.c.l.b16 %v420
    %v487 = vunpack.c.h.b16 %v420
    %v488 = vunpack.c.l.b16 %v421
    %v489 = vunpack.c.h.b16 %v421
    %v490 = vpack.c.b16 %v460, %v458
    %v491 = vpack.c.b16 %v461, %v459
    %v492 = vpack.c.b16 %v464, %v462
    %v493 = vpack.c.b16 %v465, %v463
    %v494 = vpack.c.b16 %v468, %v466
    %v495 = vpack.c.b16 %v469, %v467
    %v496 = vpack.c.b16 %v472, %v470
    %v497 = vpack.c.b16 %v473, %v471
    %v498 = vpack.c.b16 %v476, %v474
    %v499 = vpack.c.b16 %v477, %v475
    %v500 = vpack.c.b16 %v480, %v478
    %v501 = vpack.c.b16 %v481, %v479
    %v502 = vpack.c.b16 %v484, %v482
    %v503 = vpack.c.b16 %v485, %v483
    %v504 = vpack.c.b16 %v488, %v486
    %v505 = vpack.c.b16 %v489, %v487
    %522 = vmatprep.subr.bf16.mxu0 %v491
    %523 = vmatpush1.bf16.msra.mxu0 %v490
    %524 = vmatprep.subr.bf16.mxu0 %v493
    %525 = vmatpush1.bf16.msra.mxu0 %v492
    %526 = vmatprep.subr.bf16.mxu0 %v495
    %527 = vmatpush1.bf16.msra.mxu0 %v494
    %528 = vmatprep.subr.bf16.mxu0 %v497
    %529 = vmatpush1.bf16.msra.mxu0 %v496
    %530 = vmatprep.subr.bf16.mxu0 %v499
    %531 = vmatpush1.bf16.msra.mxu0 %v498
    %532 = vmatprep.subr.bf16.mxu0 %v501
    %533 = vmatpush1.bf16.msra.mxu0 %v500
    %534 = vmatprep.subr.bf16.mxu0 %v503
    %535 = vmatpush1.bf16.msra.mxu0 %v502
    %536 = vmatprep.subr.bf16.mxu0 %v505
    %537 = vmatpush1.bf16.msra.mxu0 %v504
    %538 = vmatprep.subr.bf16.mxu0 0
    %539 = vmatpush1.bf16.msra.mxu0 0
    %540 = vmatprep.subr.bf16.mxu0 0
    %541 = vmatpush1.bf16.msra.mxu0 0
    %542 = vmatprep.subr.bf16.mxu0 0
    %543 = vmatpush1.bf16.msra.mxu0 0
    %544 = vmatprep.subr.bf16.mxu0 0
    %545 = vmatpush1.bf16.msra.mxu0 0
    %546 = vmatprep.subr.bf16.mxu0 0
    %547 = vmatpush1.bf16.msra.mxu0 0
    %548 = vmatprep.subr.bf16.mxu0 0
    %549 = vmatpush1.bf16.msra.mxu0 0
    %550 = vmatprep.subr.bf16.mxu0 0
    %551 = vmatpush1.bf16.msra.mxu0 0
    %552 = vmatprep.subr.bf16.mxu0 0
    %553 = vmatpush1.bf16.msra.mxu0 0
    %554 = vmatprep.mubr.bf16.mxu0 0
    %555 = vmatmul.mubr.bf16.gmra.mrb[0].mxu0 %v422
    %v556 = vpop.f32.mrb[0].mxu0
    %v557 = vadd.f32 %v435, %v556
    %v558 = vpop.f32.mrb[0].mxu0
    %v559 = vadd.f32 %v439, %v558
    %v560 = vpop.f32.mrb[0].mxu0
    %v561 = vadd.f32 %v435, %v560
    %v562 = vpop.f32.mrb[0].mxu0
    %v563 = vadd.f32 %v439, %v562
    %564 = vmatprep.mubr.bf16.mxu0 0
    %565 = vmatmul.mubr.bf16.gmra.mrb[0].mxu0 %v423
    %v566 = vpop.f32.mrb[0].mxu0
    %v567 = vadd.f32 %v435, %v566
    %v568 = vpop.f32.mrb[0].mxu0
    %v569 = vadd.f32 %v439, %v568
    %v570 = vpop.f32.mrb[0].mxu0
    %v571 = vadd.f32 %v435, %v570
    %v572 = vpop.f32.mrb[0].mxu0
    %v573 = vadd.f32 %v439, %v572
    %574 = vmatprep.mubr.bf16.mxu0 0
    %575 = vmatmul.mubr.bf16.gmra.mrb[0].mxu0 %v424
    %v576 = vpop.f32.mrb[0].mxu0
    %v577 = vadd.f32 %v435, %v576
    %v578 = vpop.f32.mrb[0].mxu0
    %v579 = vadd.f32 %v439, %v578
    %v580 = vpop.f32.mrb[0].mxu0
    %v581 = vadd.f32 %v435, %v580
    %v582 = vpop.f32.mrb[0].mxu0
    %v583 = vadd.f32 %v439, %v582
    %584 = vmatprep.mubr.bf16.mxu0 0
    %585 = vmatmul.mubr.bf16.gmra.mrb[0].mxu0 %v425
    %v586 = vpop.f32.mrb[0].mxu0
    %v587 = vadd.f32 %v435, %v586
    %v588 = vpop.f32.mrb[0].mxu0
    %v589 = vadd.f32 %v439, %v588
    %v590 = vpop.f32.mrb[0].mxu0
    %v591 = vadd.f32 %v435, %v590
    %v592 = vpop.f32.mrb[0].mxu0
    %v593 = vadd.f32 %v439, %v592
    %594 = vmatprep.mubr.bf16.mxu0 0
    %595 = vmatmul.mubr.bf16.gmra.mrb[0].mxu0 %v426
    %v596 = vpop.f32.mrb[0].mxu0
    %v597 = vadd.f32 %v435, %v596
    %v598 = vpop.f32.mrb[0].mxu0
    %v599 = vadd.f32 %v439, %v598
    %v600 = vpop.f32.mrb[0].mxu0
    %v601 = vadd.f32 %v435, %v600
    %v602 = vpop.f32.mrb[0].mxu0
    %v603 = vadd.f32 %v439, %v602
    %604 = vmatprep.mubr.bf16.mxu0 0
    %605 = vmatmul.mubr.bf16.gmra.mrb[0].mxu0 %v427
    %v606 = vpop.f32.mrb[0].mxu0
    %v607 = vadd.f32 %v435, %v606
    %v608 = vpop.f32.mrb[0].mxu0
    %v609 = vadd.f32 %v439, %v608
    %v610 = vpop.f32.mrb[0].mxu0
    %v611 = vadd.f32 %v435, %v610
    %v612 = vpop.f32.mrb[0].mxu0
    %v613 = vadd.f32 %v439, %v612
    %614 = vmatprep.mubr.bf16.mxu0 0
    %615 = vmatmul.mubr.bf16.gmra.mrb[0].mxu0 %v428
    %v616 = vpop.f32.mrb[0].mxu0
    %v617 = vadd.f32 %v435, %v616
    %v618 = vpop.f32.mrb[0].mxu0
    %v619 = vadd.f32 %v439, %v618
    %v620 = vpop.f32.mrb[0].mxu0
    %v621 = vadd.f32 %v435, %v620
    %v622 = vpop.f32.mrb[0].mxu0
    %v623 = vadd.f32 %v439, %v622
    %624 = vmatprep.mubr.bf16.mxu0 0
    %625 = vmatmul.mubr.bf16.gmra.mrb[0].mxu0 %v429
    %v626 = vpop.f32.mrb[0].mxu0
    %v627 = vadd.f32 %v435, %v626
    %v628 = vpop.f32.mrb[0].mxu0
    %v629 = vadd.f32 %v439, %v628
    %v630 = vpop.f32.mrb[0].mxu0
    %v631 = vadd.f32 %v435, %v630
    %v632 = vpop.f32.mrb[0].mxu0
    %v633 = vadd.f32 %v439, %v632
    %634 = vdwg.mxu0
    %v635 = vmax.f32 %v557, 0.0
    %v636 = vmax.f32 %v559, 0.0
    %v637 = vmax.f32 %v561, 0.0
    %v638 = vmax.f32 %v563, 0.0
    %v639 = vmax.f32 %v567, 0.0
    %v640 = vmax.f32 %v569, 0.0
    %v641 = vmax.f32 %v571, 0.0
    %v642 = vmax.f32 %v573, 0.0
    %v643 = vmax.f32 %v577, 0.0
    %v644 = vmax.f32 %v579, 0.0
    %v645 = vmax.f32 %v581, 0.0
    %v646 = vmax.f32 %v583, 0.0
    %v647 = vmax.f32 %v587, 0.0
    %v648 = vmax.f32 %v589, 0.0
    %v649 = vmax.f32 %v591, 0.0
    %v650 = vmax.f32 %v593, 0.0
    %v651 = vmax.f32 %v597, 0.0
    %v652 = vmax.f32 %v599, 0.0
    %v653 = vmax.f32 %v601, 0.0
    %v654 = vmax.f32 %v603, 0.0
    %v655 = vmax.f32 %v607, 0.0
    %v656 = vmax.f32 %v609, 0.0
    %v657 = vmax.f32 %v611, 0.0
    %v658 = vmax.f32 %v613, 0.0
    %v659 = vmax.f32 %v617, 0.0
    %v660 = vmax.f32 %v619, 0.0
    %v661 = vmax.f32 %v621, 0.0
    %v662 = vmax.f32 %v623, 0.0
    %v663 = vmax.f32 %v627, 0.0
    %v664 = vmax.f32 %v629, 0.0
    %v665 = vmax.f32 %v631, 0.0
    %v666 = vmax.f32 %v633, 0.0
    %v667 = vld [vmem:[#allocation8] sm:$0xff]
    %v668 = vld [vmem:[#allocation8 + $0x8] sm:$0xff]
    %v669 = vld [vmem:[#allocation8 + $0x10] sm:$0xff]
    %v670 = vld [vmem:[#allocation8 + $0x18] sm:$0xff]
    %v671 = vld [vmem:[#allocation8 + $0x20] sm:$0xff]
    %v672 = vld [vmem:[#allocation8 + $0x28] sm:$0xff]
    %v673 = vld [vmem:[#allocation8 + $0x30] sm:$0xff]
    %v674 = vld [vmem:[#allocation8 + $0x38] sm:$0xff]
    %v675 = vld [vmem:[#allocation8 + $0x40] sm:$0xff]
    %v676 = vld [vmem:[#allocation8 + $0x48] sm:$0xff]
    %v677 = vld [vmem:[#allocation8 + $0x50] sm:$0xff]
    %v678 = vld [vmem:[#allocation8 + $0x58] sm:$0xff]
    %v679 = vld [vmem:[#allocation8 + $0x60] sm:$0xff]
    %v680 = vld [vmem:[#allocation8 + $0x68] sm:$0xff]
    %v681 = vld [vmem:[#allocation8 + $0x70] sm:$0xff]
    %v682 = vld [vmem:[#allocation8 + $0x78] sm:$0xff]
    %v683 = vld [vmem:[#allocation8 + $0x80] sm:$0xff]
    %v684 = vld [vmem:[#allocation8 + $0x88] sm:$0xff]
    %v685 = vld [vmem:[#allocation8 + $0x90] sm:$0xff]
    %v686 = vld [vmem:[#allocation8 + $0x98] sm:$0xff]
    %v687 = vld [vmem:[#allocation8 + $0xa0] sm:$0xff]
    %v688 = vld [vmem:[#allocation8 + $0xa8] sm:$0xff]
    %v689 = vld [vmem:[#allocation8 + $0xb0] sm:$0xff]
    %v690 = vld [vmem:[#allocation8 + $0xb8] sm:$0xff]
    %v691 = vld [vmem:[#allocation8 + $0xc0] sm:$0xff]
    %v692 = vld [vmem:[#allocation8 + $0xc8] sm:$0xff]
    %v693 = vld [vmem:[#allocation8 + $0xd0] sm:$0xff]
    %v694 = vld [vmem:[#allocation8 + $0xd8] sm:$0xff]
    %v695 = vld [vmem:[#allocation8 + $0xe0] sm:$0xff]
    %v696 = vld [vmem:[#allocation8 + $0xe8] sm:$0xff]
    %v697 = vld [vmem:[#allocation8 + $0xf0] sm:$0xff]
    %v698 = vld [vmem:[#allocation8 + $0xf8] sm:$0xff]
    %v699 = vpack.c.bf16 %v637, %v635
    %v700 = vpack.c.bf16 %v638, %v636
    %v701 = vpack.c.bf16 %v641, %v639
    %v702 = vpack.c.bf16 %v642, %v640
    %v703 = vpack.c.bf16 %v645, %v643
    %v704 = vpack.c.bf16 %v646, %v644
    %v705 = vpack.c.bf16 %v649, %v647
    %v706 = vpack.c.bf16 %v650, %v648
    %v707 = vpack.c.bf16 %v653, %v651
    %v708 = vpack.c.bf16 %v654, %v652
    %v709 = vpack.c.bf16 %v657, %v655
    %v710 = vpack.c.bf16 %v658, %v656
    %v711 = vpack.c.bf16 %v661, %v659
    %v712 = vpack.c.bf16 %v662, %v660
    %v713 = vpack.c.bf16 %v665, %v663
    %v714 = vpack.c.bf16 %v666, %v664
    %v715 = vld [vmem:[%s6 + $0x3] sm:$0x3]
    %v717 = vlaneseq
    %v718 = vshrl.u32 %v717, 7
    %v719 = vsub.s32 0, %v718
    %v720 = vrot.slane %v715, %v719
    %v721 = vlaneseq
    %v722 = vshrl.u32 %v721, 7
    %v723 = vsub.s32 1, %v722
    %v724 = vrot.slane %v715, %v723
    %v759 = vunpack.c.l.b16 %v667
    %v760 = vunpack.c.h.b16 %v667
    %v761 = vunpack.c.l.b16 %v668
    %v762 = vunpack.c.h.b16 %v668
    %v763 = vunpack.c.l.b16 %v669
    %v764 = vunpack.c.h.b16 %v669
    %v765 = vunpack.c.l.b16 %v670
    %v766 = vunpack.c.h.b16 %v670
    %v767 = vunpack.c.l.b16 %v671
    %v768 = vunpack.c.h.b16 %v671
    %v769 = vunpack.c.l.b16 %v672
    %v770 = vunpack.c.h.b16 %v672
    %v771 = vunpack.c.l.b16 %v673
    %v772 = vunpack.c.h.b16 %v673
    %v773 = vunpack.c.l.b16 %v674
    %v774 = vunpack.c.h.b16 %v674
    %v775 = vunpack.c.l.b16 %v675
    %v776 = vunpack.c.h.b16 %v675
    %v777 = vunpack.c.l.b16 %v676
    %v778 = vunpack.c.h.b16 %v676
    %v779 = vunpack.c.l.b16 %v677
    %v780 = vunpack.c.h.b16 %v677
    %v781 = vunpack.c.l.b16 %v678
    %v782 = vunpack.c.h.b16 %v678
    %v783 = vunpack.c.l.b16 %v679
    %v784 = vunpack.c.h.b16 %v679
    %v785 = vunpack.c.l.b16 %v680
    %v786 = vunpack.c.h.b16 %v680
    %v787 = vunpack.c.l.b16 %v681
    %v788 = vunpack.c.h.b16 %v681
    %v789 = vunpack.c.l.b16 %v682
    %v790 = vunpack.c.h.b16 %v682
    %v791 = vunpack.c.l.b16 %v683
    %v792 = vunpack.c.h.b16 %v683
    %v793 = vunpack.c.l.b16 %v684
    %v794 = vunpack.c.h.b16 %v684
    %v795 = vunpack.c.l.b16 %v685
    %v796 = vunpack.c.h.b16 %v685
    %v797 = vunpack.c.l.b16 %v686
    %v798 = vunpack.c.h.b16 %v686
    %v799 = vunpack.c.l.b16 %v687
    %v800 = vunpack.c.h.b16 %v687
    %v801 = vunpack.c.l.b16 %v688
    %v802 = vunpack.c.h.b16 %v688
    %v803 = vunpack.c.l.b16 %v689
    %v804 = vunpack.c.h.b16 %v689
    %v805 = vunpack.c.l.b16 %v690
    %v806 = vunpack.c.h.b16 %v690
    %v807 = vunpack.c.l.b16 %v691
    %v808 = vunpack.c.h.b16 %v691
    %v809 = vunpack.c.l.b16 %v692
    %v810 = vunpack.c.h.b16 %v692
    %v811 = vunpack.c.l.b16 %v693
    %v812 = vunpack.c.h.b16 %v693
    %v813 = vunpack.c.l.b16 %v694
    %v814 = vunpack.c.h.b16 %v694
    %v815 = vunpack.c.l.b16 %v695
    %v816 = vunpack.c.h.b16 %v695
    %v817 = vunpack.c.l.b16 %v696
    %v818 = vunpack.c.h.b16 %v696
    %v819 = vunpack.c.l.b16 %v697
    %v820 = vunpack.c.h.b16 %v697
    %v821 = vunpack.c.l.b16 %v698
    %v822 = vunpack.c.h.b16 %v698
    %v823 = vpack.c.b16 %v761, %v759
    %v824 = vpack.c.b16 %v762, %v760
    %v825 = vpack.c.b16 %v765, %v763
    %v826 = vpack.c.b16 %v766, %v764
    %v827 = vpack.c.b16 %v769, %v767
    %v828 = vpack.c.b16 %v770, %v768
    %v829 = vpack.c.b16 %v773, %v771
    %v830 = vpack.c.b16 %v774, %v772
    %v831 = vpack.c.b16 %v777, %v775
    %v832 = vpack.c.b16 %v778, %v776
    %v833 = vpack.c.b16 %v781, %v779
    %v834 = vpack.c.b16 %v782, %v780
    %v835 = vpack.c.b16 %v785, %v783
    %v836 = vpack.c.b16 %v786, %v784
    %v837 = vpack.c.b16 %v789, %v787
    %v838 = vpack.c.b16 %v790, %v788
    %v839 = vpack.c.b16 %v793, %v791
    %v840 = vpack.c.b16 %v794, %v792
    %v841 = vpack.c.b16 %v797, %v795
    %v842 = vpack.c.b16 %v798, %v796
    %v843 = vpack.c.b16 %v801, %v799
    %v844 = vpack.c.b16 %v802, %v800
    %v845 = vpack.c.b16 %v805, %v803
    %v846 = vpack.c.b16 %v806, %v804
    %v847 = vpack.c.b16 %v809, %v807
    %v848 = vpack.c.b16 %v810, %v808
    %v849 = vpack.c.b16 %v813, %v811
    %v850 = vpack.c.b16 %v814, %v812
    %v851 = vpack.c.b16 %v817, %v815
    %v852 = vpack.c.b16 %v818, %v816
    %v853 = vpack.c.b16 %v821, %v819
    %v854 = vpack.c.b16 %v822, %v820
    %887 = vmatprep.subr.bf16.mxu0 %v824
    %888 = vmatpush1.bf16.msra.mxu0 %v823
    %889 = vmatprep.subr.bf16.mxu0 %v826
    %890 = vmatpush1.bf16.msra.mxu0 %v825
    %891 = vmatprep.subr.bf16.mxu0 %v828
    %892 = vmatpush1.bf16.msra.mxu0 %v827
    %893 = vmatprep.subr.bf16.mxu0 %v830
    %894 = vmatpush1.bf16.msra.mxu0 %v829
    %895 = vmatprep.subr.bf16.mxu0 %v832
    %896 = vmatpush1.bf16.msra.mxu0 %v831
    %897 = vmatprep.subr.bf16.mxu0 %v834
    %898 = vmatpush1.bf16.msra.mxu0 %v833
    %899 = vmatprep.subr.bf16.mxu0 %v836
    %900 = vmatpush1.bf16.msra.mxu0 %v835
    %901 = vmatprep.subr.bf16.mxu0 %v838
    %902 = vmatpush1.bf16.msra.mxu0 %v837
    %903 = vmatprep.subr.bf16.mxu0 %v840
    %904 = vmatpush1.bf16.msra.mxu0 %v839
    %905 = vmatprep.subr.bf16.mxu0 %v842
    %906 = vmatpush1.bf16.msra.mxu0 %v841
    %907 = vmatprep.subr.bf16.mxu0 %v844
    %908 = vmatpush1.bf16.msra.mxu0 %v843
    %909 = vmatprep.subr.bf16.mxu0 %v846
    %910 = vmatpush1.bf16.msra.mxu0 %v845
    %911 = vmatprep.subr.bf16.mxu0 %v848
    %912 = vmatpush1.bf16.msra.mxu0 %v847
    %913 = vmatprep.subr.bf16.mxu0 %v850
    %914 = vmatpush1.bf16.msra.mxu0 %v849
    %915 = vmatprep.subr.bf16.mxu0 %v852
    %916 = vmatpush1.bf16.msra.mxu0 %v851
    %917 = vmatprep.subr.bf16.mxu0 %v854
    %918 = vmatpush1.bf16.msra.mxu0 %v853
    %919 = vmatprep.mubr.bf16.mxu0 %v700
    %920 = vmatmul.mubr.bf16.gmra.mrb[0].mxu0 %v699
    %v921 = vpop.f32.mrb[0].mxu0
    %v922 = vadd.f32 %v720, %v921
    %v923 = vpop.f32.mrb[0].mxu0
    %v924 = vadd.f32 %v724, %v923
    %v925 = vpop.f32.mrb[0].mxu0
    %v926 = vadd.f32 %v720, %v925
    %v927 = vpop.f32.mrb[0].mxu0
    %v928 = vadd.f32 %v724, %v927
    %929 = vmatprep.mubr.bf16.mxu0 %v702
    %930 = vmatmul.mubr.bf16.gmra.mrb[0].mxu0 %v701
    %v931 = vpop.f32.mrb[0].mxu0
    %v932 = vadd.f32 %v720, %v931
    %v933 = vpop.f32.mrb[0].mxu0
    %v934 = vadd.f32 %v724, %v933
    %v935 = vpop.f32.mrb[0].mxu0
    %v936 = vadd.f32 %v720, %v935
    %v937 = vpop.f32.mrb[0].mxu0
    %v938 = vadd.f32 %v724, %v937
    %939 = vmatprep.mubr.bf16.mxu0 %v704
    %940 = vmatmul.mubr.bf16.gmra.mrb[0].mxu0 %v703
    %v941 = vpop.f32.mrb[0].mxu0
    %v942 = vadd.f32 %v720, %v941
    %v943 = vpop.f32.mrb[0].mxu0
    %v944 = vadd.f32 %v724, %v943
    %v945 = vpop.f32.mrb[0].mxu0
    %v946 = vadd.f32 %v720, %v945
    %v947 = vpop.f32.mrb[0].mxu0
    %v948 = vadd.f32 %v724, %v947
    %949 = vmatprep.mubr.bf16.mxu0 %v706
    %950 = vmatmul.mubr.bf16.gmra.mrb[0].mxu0 %v705
    %v951 = vpop.f32.mrb[0].mxu0
    %v952 = vadd.f32 %v720, %v951
    %v953 = vpop.f32.mrb[0].mxu0
    %v954 = vadd.f32 %v724, %v953
    %v955 = vpop.f32.mrb[0].mxu0
    %v956 = vadd.f32 %v720, %v955
    %v957 = vpop.f32.mrb[0].mxu0
    %v958 = vadd.f32 %v724, %v957
    %959 = vmatprep.mubr.bf16.mxu0 %v708
    %960 = vmatmul.mubr.bf16.gmra.mrb[0].mxu0 %v707
    %v961 = vpop.f32.mrb[0].mxu0
    %v962 = vadd.f32 %v720, %v961
    %v963 = vpop.f32.mrb[0].mxu0
    %v964 = vadd.f32 %v724, %v963
    %v965 = vpop.f32.mrb[0].mxu0
    %v966 = vadd.f32 %v720, %v965
    %v967 = vpop.f32.mrb[0].mxu0
    %v968 = vadd.f32 %v724, %v967
    %969 = vmatprep.mubr.bf16.mxu0 %v710
    %970 = vmatmul.mubr.bf16.gmra.mrb[0].mxu0 %v709
    %v971 = vpop.f32.mrb[0].mxu0
    %v972 = vadd.f32 %v720, %v971
    %v973 = vpop.f32.mrb[0].mxu0
    %v974 = vadd.f32 %v724, %v973
    %v975 = vpop.f32.mrb[0].mxu0
    %v976 = vadd.f32 %v720, %v975
    %v977 = vpop.f32.mrb[0].mxu0
    %v978 = vadd.f32 %v724, %v977
    %979 = vmatprep.mubr.bf16.mxu0 %v712
    %980 = vmatmul.mubr.bf16.gmra.mrb[0].mxu0 %v711
    %v981 = vpop.f32.mrb[0].mxu0
    %v982 = vadd.f32 %v720, %v981
    %v983 = vpop.f32.mrb[0].mxu0
    %v984 = vadd.f32 %v724, %v983
    %v985 = vpop.f32.mrb[0].mxu0
    %v986 = vadd.f32 %v720, %v985
    %v987 = vpop.f32.mrb[0].mxu0
    %v988 = vadd.f32 %v724, %v987
    %989 = vmatprep.mubr.bf16.mxu0 %v714
    %990 = vmatmul.mubr.bf16.gmra.mrb[0].mxu0 %v713
    %v991 = vpop.f32.mrb[0].mxu0
    %v992 = vadd.f32 %v720, %v991
    %v993 = vpop.f32.mrb[0].mxu0
    %v994 = vadd.f32 %v724, %v993
    %v995 = vpop.f32.mrb[0].mxu0
    %v996 = vadd.f32 %v720, %v995
    %v997 = vpop.f32.mrb[0].mxu0
    %v998 = vadd.f32 %v724, %v997
    %999 = vdwg.mxu0
    %v1000 = vmax.f32 %v922, 0.0
    %v1001 = vmax.f32 %v924, 0.0
    %v1002 = vmax.f32 %v926, 0.0
    %v1003 = vmax.f32 %v928, 0.0
    %v1004 = vmax.f32 %v932, 0.0
    %v1005 = vmax.f32 %v934, 0.0
    %v1006 = vmax.f32 %v936, 0.0
    %v1007 = vmax.f32 %v938, 0.0
    %v1008 = vmax.f32 %v942, 0.0
    %v1009 = vmax.f32 %v944, 0.0
    %v1010 = vmax.f32 %v946, 0.0
    %v1011 = vmax.f32 %v948, 0.0
    %v1012 = vmax.f32 %v952, 0.0
    %v1013 = vmax.f32 %v954, 0.0
    %v1014 = vmax.f32 %v956, 0.0
    %v1015 = vmax.f32 %v958, 0.0
    %v1016 = vmax.f32 %v962, 0.0
    %v1017 = vmax.f32 %v964, 0.0
    %v1018 = vmax.f32 %v966, 0.0
    %v1019 = vmax.f32 %v968, 0.0
    %v1020 = vmax.f32 %v972, 0.0
    %v1021 = vmax.f32 %v974, 0.0
    %v1022 = vmax.f32 %v976, 0.0
    %v1023 = vmax.f32 %v978, 0.0
    %v1024 = vmax.f32 %v982, 0.0
    %v1025 = vmax.f32 %v984, 0.0
    %v1026 = vmax.f32 %v986, 0.0
    %v1027 = vmax.f32 %v988, 0.0
    %v1028 = vmax.f32 %v992, 0.0
    %v1029 = vmax.f32 %v994, 0.0
    %v1030 = vmax.f32 %v996, 0.0
    %v1031 = vmax.f32 %v998, 0.0
    %v1032 = vld [vmem:[#allocation10] sm:$0xf]
    %v1033 = vld [vmem:[#allocation10 + $0x4] sm:$0xf]
    %v1034 = vld [vmem:[#allocation10 + $0x8] sm:$0xf]
    %v1035 = vld [vmem:[#allocation10 + $0xc] sm:$0xf]
    %v1036 = vld [vmem:[#allocation10 + $0x10] sm:$0xf]
    %v1037 = vld [vmem:[#allocation10 + $0x14] sm:$0xf]
    %v1038 = vld [vmem:[#allocation10 + $0x18] sm:$0xf]
    %v1039 = vld [vmem:[#allocation10 + $0x1c] sm:$0xf]
    %v1040 = vld [vmem:[#allocation10 + $0x20] sm:$0xf]
    %v1041 = vld [vmem:[#allocation10 + $0x24] sm:$0xf]
    %v1042 = vld [vmem:[#allocation10 + $0x28] sm:$0xf]
    %v1043 = vld [vmem:[#allocation10 + $0x2c] sm:$0xf]
    %v1044 = vld [vmem:[#allocation10 + $0x30] sm:$0xf]
    %v1045 = vld [vmem:[#allocation10 + $0x34] sm:$0xf]
    %v1046 = vld [vmem:[#allocation10 + $0x38] sm:$0xf]
    %v1047 = vld [vmem:[#allocation10 + $0x3c] sm:$0xf]
    %v1048 = vld [vmem:[#allocation10 + $0x40] sm:$0xf]
    %v1049 = vld [vmem:[#allocation10 + $0x44] sm:$0xf]
    %v1050 = vld [vmem:[#allocation10 + $0x48] sm:$0xf]
    %v1051 = vld [vmem:[#allocation10 + $0x4c] sm:$0xf]
    %v1052 = vld [vmem:[#allocation10 + $0x50] sm:$0xf]
    %v1053 = vld [vmem:[#allocation10 + $0x54] sm:$0xf]
    %v1054 = vld [vmem:[#allocation10 + $0x58] sm:$0xf]
    %v1055 = vld [vmem:[#allocation10 + $0x5c] sm:$0xf]
    %v1056 = vld [vmem:[#allocation10 + $0x60] sm:$0xf]
    %v1057 = vld [vmem:[#allocation10 + $0x64] sm:$0xf]
    %v1058 = vld [vmem:[#allocation10 + $0x68] sm:$0xf]
    %v1059 = vld [vmem:[#allocation10 + $0x6c] sm:$0xf]
    %v1060 = vld [vmem:[#allocation10 + $0x70] sm:$0xf]
    %v1061 = vld [vmem:[#allocation10 + $0x74] sm:$0xf]
    %v1062 = vld [vmem:[#allocation10 + $0x78] sm:$0xf]
    %v1063 = vld [vmem:[#allocation10 + $0x7c] sm:$0xf]
    %v1064 = vpack.c.bf16 %v1002, %v1000
    %v1065 = vpack.c.bf16 %v1003, %v1001
    %v1066 = vpack.c.bf16 %v1006, %v1004
    %v1067 = vpack.c.bf16 %v1007, %v1005
    %v1068 = vpack.c.bf16 %v1010, %v1008
    %v1069 = vpack.c.bf16 %v1011, %v1009
    %v1070 = vpack.c.bf16 %v1014, %v1012
    %v1071 = vpack.c.bf16 %v1015, %v1013
    %v1072 = vpack.c.bf16 %v1018, %v1016
    %v1073 = vpack.c.bf16 %v1019, %v1017
    %v1074 = vpack.c.bf16 %v1022, %v1020
    %v1075 = vpack.c.bf16 %v1023, %v1021
    %v1076 = vpack.c.bf16 %v1026, %v1024
    %v1077 = vpack.c.bf16 %v1027, %v1025
    %v1078 = vpack.c.bf16 %v1030, %v1028
    %v1079 = vpack.c.bf16 %v1031, %v1029
    %v1080 = vld [vmem:[%s6 + $0x5] sm:$0x1]
    %v1082 = vlaneseq
    %v1083 = vshrl.u32 %v1082, 7
    %v1084 = vsub.s32 0, %v1083
    %v1085 = vrot.slane %v1080, %v1084
    %v1119 = vunpack.c.l.b16 %v1032
    %v1120 = vunpack.c.l.b16 %v1033
    %v1121 = vunpack.c.l.b16 %v1034
    %v1122 = vunpack.c.l.b16 %v1035
    %v1123 = vunpack.c.l.b16 %v1036
    %v1124 = vunpack.c.l.b16 %v1037
    %v1125 = vunpack.c.l.b16 %v1038
    %v1126 = vunpack.c.l.b16 %v1039
    %v1127 = vunpack.c.l.b16 %v1040
    %v1128 = vunpack.c.l.b16 %v1041
    %v1129 = vunpack.c.l.b16 %v1042
    %v1130 = vunpack.c.l.b16 %v1043
    %v1131 = vunpack.c.l.b16 %v1044
    %v1132 = vunpack.c.l.b16 %v1045
    %v1133 = vunpack.c.l.b16 %v1046
    %v1134 = vunpack.c.l.b16 %v1047
    %v1135 = vunpack.c.l.b16 %v1048
    %v1136 = vunpack.c.l.b16 %v1049
    %v1137 = vunpack.c.l.b16 %v1050
    %v1138 = vunpack.c.l.b16 %v1051
    %v1139 = vunpack.c.l.b16 %v1052
    %v1140 = vunpack.c.l.b16 %v1053
    %v1141 = vunpack.c.l.b16 %v1054
    %v1142 = vunpack.c.l.b16 %v1055
    %v1143 = vunpack.c.l.b16 %v1056
    %v1144 = vunpack.c.l.b16 %v1057
    %v1145 = vunpack.c.l.b16 %v1058
    %v1146 = vunpack.c.l.b16 %v1059
    %v1147 = vunpack.c.l.b16 %v1060
    %v1148 = vunpack.c.l.b16 %v1061
    %v1149 = vunpack.c.l.b16 %v1062
    %v1150 = vunpack.c.l.b16 %v1063
    %v1151 = vpack.c.b16 %v1120, %v1119
    %v1152 = vpack.c.b16 %v1122, %v1121
    %v1153 = vpack.c.b16 %v1124, %v1123
    %v1154 = vpack.c.b16 %v1126, %v1125
    %v1155 = vpack.c.b16 %v1128, %v1127
    %v1156 = vpack.c.b16 %v1130, %v1129
    %v1157 = vpack.c.b16 %v1132, %v1131
    %v1158 = vpack.c.b16 %v1134, %v1133
    %v1159 = vpack.c.b16 %v1136, %v1135
    %v1160 = vpack.c.b16 %v1138, %v1137
    %v1161 = vpack.c.b16 %v1140, %v1139
    %v1162 = vpack.c.b16 %v1142, %v1141
    %v1163 = vpack.c.b16 %v1144, %v1143
    %v1164 = vpack.c.b16 %v1146, %v1145
    %v1165 = vpack.c.b16 %v1148, %v1147
    %v1166 = vpack.c.b16 %v1150, %v1149
    %1183 = vmatprep.subr.bf16.mxu0 0
    %1184 = vmatpush1.bf16.msra.mxu0 %v1151
    %1185 = vmatprep.subr.bf16.mxu0 0
    %1186 = vmatpush1.bf16.msra.mxu0 %v1152
    %1187 = vmatprep.subr.bf16.mxu0 0
    %1188 = vmatpush1.bf16.msra.mxu0 %v1153
    %1189 = vmatprep.subr.bf16.mxu0 0
    %1190 = vmatpush1.bf16.msra.mxu0 %v1154
    %1191 = vmatprep.subr.bf16.mxu0 0
    %1192 = vmatpush1.bf16.msra.mxu0 %v1155
    %1193 = vmatprep.subr.bf16.mxu0 0
    %1194 = vmatpush1.bf16.msra.mxu0 %v1156
    %1195 = vmatprep.subr.bf16.mxu0 0
    %1196 = vmatpush1.bf16.msra.mxu0 %v1157
    %1197 = vmatprep.subr.bf16.mxu0 0
    %1198 = vmatpush1.bf16.msra.mxu0 %v1158
    %1199 = vmatprep.subr.bf16.mxu0 0
    %1200 = vmatpush1.bf16.msra.mxu0 %v1159
    %1201 = vmatprep.subr.bf16.mxu0 0
    %1202 = vmatpush1.bf16.msra.mxu0 %v1160
    %1203 = vmatprep.subr.bf16.mxu0 0
    %1204 = vmatpush1.bf16.msra.mxu0 %v1161
    %1205 = vmatprep.subr.bf16.mxu0 0
    %1206 = vmatpush1.bf16.msra.mxu0 %v1162
    %1207 = vmatprep.subr.bf16.mxu0 0
    %1208 = vmatpush1.bf16.msra.mxu0 %v1163
    %1209 = vmatprep.subr.bf16.mxu0 0
    %1210 = vmatpush1.bf16.msra.mxu0 %v1164
    %1211 = vmatprep.subr.bf16.mxu0 0
    %1212 = vmatpush1.bf16.msra.mxu0 %v1165
    %1213 = vmatprep.subr.bf16.mxu0 0
    %1214 = vmatpush1.bf16.msra.mxu0 %v1166
    %1215 = vmatprep.mubr.bf16.mxu0 %v1065
    %1216 = vmatmul.mubr.bf16.gmra.mrb[0].mxu0 %v1064
    %v1217 = vpop.f32.mrb[0].mxu0
    %v1218 = vadd.f32 %v1085, %v1217
    %v1219 = vpop.f32.mrb[0].mxu0
    %v1220 = vpop.f32.mrb[0].mxu0
    %v1221 = vadd.f32 %v1085, %v1220
    %v1222 = vpop.f32.mrb[0].mxu0
    %1223 = vmatprep.mubr.bf16.mxu0 %v1067
    %1224 = vmatmul.mubr.bf16.gmra.mrb[0].mxu0 %v1066
    %v1225 = vpop.f32.mrb[0].mxu0
    %v1226 = vadd.f32 %v1085, %v1225
    %v1227 = vpop.f32.mrb[0].mxu0
    %v1228 = vpop.f32.mrb[0].mxu0
    %v1229 = vadd.f32 %v1085, %v1228
    %v1230 = vpop.f32.mrb[0].mxu0
    %1231 = vmatprep.mubr.bf16.mxu0 %v1069
    %1232 = vmatmul.mubr.bf16.gmra.mrb[0].mxu0 %v1068
    %v1233 = vpop.f32.mrb[0].mxu0
    %v1234 = vadd.f32 %v1085, %v1233
    %v1235 = vpop.f32.mrb[0].mxu0
    %v1236 = vpop.f32.mrb[0].mxu0
    %v1237 = vadd.f32 %v1085, %v1236
    %v1238 = vpop.f32.mrb[0].mxu0
    %1239 = vmatprep.mubr.bf16.mxu0 %v1071
    %1240 = vmatmul.mubr.bf16.gmra.mrb[0].mxu0 %v1070
    %v1241 = vpop.f32.mrb[0].mxu0
    %v1242 = vadd.f32 %v1085, %v1241
    %v1243 = vpop.f32.mrb[0].mxu0
    %v1244 = vpop.f32.mrb[0].mxu0
    %v1245 = vadd.f32 %v1085, %v1244
    %v1246 = vpop.f32.mrb[0].mxu0
    %1247 = vmatprep.mubr.bf16.mxu0 %v1073
    %1248 = vmatmul.mubr.bf16.gmra.mrb[0].mxu0 %v1072
    %v1249 = vpop.f32.mrb[0].mxu0
    %v1250 = vadd.f32 %v1085, %v1249
    %v1251 = vpop.f32.mrb[0].mxu0
    %v1252 = vpop.f32.mrb[0].mxu0
    %v1253 = vadd.f32 %v1085, %v1252
    %v1254 = vpop.f32.mrb[0].mxu0
    %1255 = vmatprep.mubr.bf16.mxu0 %v1075
    %1256 = vmatmul.mubr.bf16.gmra.mrb[0].mxu0 %v1074
    %v1257 = vpop.f32.mrb[0].mxu0
    %v1258 = vadd.f32 %v1085, %v1257
    %v1259 = vpop.f32.mrb[0].mxu0
    %v1260 = vpop.f32.mrb[0].mxu0
    %v1261 = vadd.f32 %v1085, %v1260
    %v1262 = vpop.f32.mrb[0].mxu0
    %1263 = vmatprep.mubr.bf16.mxu0 %v1077
    %1264 = vmatmul.mubr.bf16.gmra.mrb[0].mxu0 %v1076
    %v1265 = vpop.f32.mrb[0].mxu0
    %v1266 = vadd.f32 %v1085, %v1265
    %v1267 = vpop.f32.mrb[0].mxu0
    %v1268 = vpop.f32.mrb[0].mxu0
    %v1269 = vadd.f32 %v1085, %v1268
    %v1270 = vpop.f32.mrb[0].mxu0
    %1271 = vmatprep.mubr.bf16.mxu0 %v1079
    %1272 = vmatmul.mubr.bf16.gmra.mrb[0].mxu0 %v1078
    %v1273 = vpop.f32.mrb[0].mxu0
    %v1274 = vadd.f32 %v1085, %v1273
    %v1275 = vpop.f32.mrb[0].mxu0
    %v1276 = vpop.f32.mrb[0].mxu0
    %v1277 = vadd.f32 %v1085, %v1276
    %v1278 = vpop.f32.mrb[0].mxu0
    %1279 = vdwg.mxu0
    %v1280 = vmax.f32 %v1218, 0.0
    %v1281 = vmax.f32 %v1221, 0.0
    %v1282 = vmax.f32 %v1226, 0.0
    %v1283 = vmax.f32 %v1229, 0.0
    %v1284 = vmax.f32 %v1234, 0.0
    %v1285 = vmax.f32 %v1237, 0.0
    %v1286 = vmax.f32 %v1242, 0.0
    %v1287 = vmax.f32 %v1245, 0.0
    %v1288 = vmax.f32 %v1250, 0.0
    %v1289 = vmax.f32 %v1253, 0.0
    %v1290 = vmax.f32 %v1258, 0.0
    %v1291 = vmax.f32 %v1261, 0.0
    %v1292 = vmax.f32 %v1266, 0.0
    %v1293 = vmax.f32 %v1269, 0.0
    %v1294 = vmax.f32 %v1274, 0.0
    %v1295 = vmax.f32 %v1277, 0.0
    %v1296 = vld [vmem:[#allocation11] sm:$0xf]
    %v1297 = vld [vmem:[#allocation11 + $0x4] sm:$0xf]
    %v1298 = vld [vmem:[#allocation11 + $0x8] sm:$0xf]
    %v1299 = vld [vmem:[#allocation11 + $0xc] sm:$0xf]
    %v1300 = vld [vmem:[#allocation11 + $0x10] sm:$0xf]
    %v1301 = vld [vmem:[#allocation11 + $0x14] sm:$0xf]
    %v1302 = vld [vmem:[#allocation11 + $0x18] sm:$0xf]
    %v1303 = vld [vmem:[#allocation11 + $0x1c] sm:$0xf]
    %v1304 = vld [vmem:[#allocation11 + $0x20] sm:$0xf]
    %v1305 = vld [vmem:[#allocation11 + $0x24] sm:$0xf]
    %v1306 = vld [vmem:[#allocation11 + $0x28] sm:$0xf]
    %v1307 = vld [vmem:[#allocation11 + $0x2c] sm:$0xf]
    %v1308 = vld [vmem:[#allocation11 + $0x30] sm:$0xf]
    %v1309 = vld [vmem:[#allocation11 + $0x34] sm:$0xf]
    %v1310 = vld [vmem:[#allocation11 + $0x38] sm:$0xf]
    %v1311 = vld [vmem:[#allocation11 + $0x3c] sm:$0xf]
    %v1312 = vpack.c.bf16 %v1281, %v1280
    %v1313 = vpack.c.bf16 %v1283, %v1282
    %v1314 = vpack.c.bf16 %v1285, %v1284
    %v1315 = vpack.c.bf16 %v1287, %v1286
    %v1316 = vpack.c.bf16 %v1289, %v1288
    %v1317 = vpack.c.bf16 %v1291, %v1290
    %v1318 = vpack.c.bf16 %v1293, %v1292
    %v1319 = vpack.c.bf16 %v1295, %v1294
    %v1320 = vld [vmem:[%s6 + $0x6] sm:$0x1]
    %v1322 = vlaneseq
    %v1323 = vshrl.u32 %v1322, 7
    %v1324 = vsub.s32 0, %v1323
    %v1325 = vrot.slane %v1320, %v1324
    %v1343 = vunpack.c.l.b16 %v1296
    %v1344 = vunpack.c.l.b16 %v1297
    %v1345 = vunpack.c.l.b16 %v1298
    %v1346 = vunpack.c.l.b16 %v1299
    %v1347 = vunpack.c.l.b16 %v1300
    %v1348 = vunpack.c.l.b16 %v1301
    %v1349 = vunpack.c.l.b16 %v1302
    %v1350 = vunpack.c.l.b16 %v1303
    %v1351 = vunpack.c.l.b16 %v1304
    %v1352 = vunpack.c.l.b16 %v1305
    %v1353 = vunpack.c.l.b16 %v1306
    %v1354 = vunpack.c.l.b16 %v1307
    %v1355 = vunpack.c.l.b16 %v1308
    %v1356 = vunpack.c.l.b16 %v1309
    %v1357 = vunpack.c.l.b16 %v1310
    %v1358 = vunpack.c.l.b16 %v1311
    %v1359 = vpack.c.b16 %v1344, %v1343
    %v1360 = vpack.c.b16 %v1346, %v1345
    %v1361 = vpack.c.b16 %v1348, %v1347
    %v1362 = vpack.c.b16 %v1350, %v1349
    %v1363 = vpack.c.b16 %v1352, %v1351
    %v1364 = vpack.c.b16 %v1354, %v1353
    %v1365 = vpack.c.b16 %v1356, %v1355
    %v1366 = vpack.c.b16 %v1358, %v1357
    %1375 = vmatprep.subr.bf16.mxu0 0
    %1376 = vmatpush1.bf16.msra.mxu0 %v1359
    %1377 = vmatprep.subr.bf16.mxu0 0
    %1378 = vmatpush1.bf16.msra.mxu0 %v1360
    %1379 = vmatprep.subr.bf16.mxu0 0
    %1380 = vmatpush1.bf16.msra.mxu0 %v1361
    %1381 = vmatprep.subr.bf16.mxu0 0
    %1382 = vmatpush1.bf16.msra.mxu0 %v1362
    %1383 = vmatprep.subr.bf16.mxu0 0
    %1384 = vmatpush1.bf16.msra.mxu0 %v1363
    %1385 = vmatprep.subr.bf16.mxu0 0
    %1386 = vmatpush1.bf16.msra.mxu0 %v1364
    %1387 = vmatprep.subr.bf16.mxu0 0
    %1388 = vmatpush1.bf16.msra.mxu0 %v1365
    %1389 = vmatprep.subr.bf16.mxu0 0
    %1390 = vmatpush1.bf16.msra.mxu0 %v1366
    %1391 = vmatprep.subr.bf16.mxu0 0
    %1392 = vmatpush1.bf16.msra.mxu0 0
    %1393 = vmatprep.subr.bf16.mxu0 0
    %1394 = vmatpush1.bf16.msra.mxu0 0
    %1395 = vmatprep.subr.bf16.mxu0 0
    %1396 = vmatpush1.bf16.msra.mxu0 0
    %1397 = vmatprep.subr.bf16.mxu0 0
    %1398 = vmatpush1.bf16.msra.mxu0 0
    %1399 = vmatprep.subr.bf16.mxu0 0
    %1400 = vmatpush1.bf16.msra.mxu0 0
    %1401 = vmatprep.subr.bf16.mxu0 0
    %1402 = vmatpush1.bf16.msra.mxu0 0
    %1403 = vmatprep.subr.bf16.mxu0 0
    %1404 = vmatpush1.bf16.msra.mxu0 0
    %1405 = vmatprep.subr.bf16.mxu0 0
    %1406 = vmatpush1.bf16.msra.mxu0 0
    %1407 = vmatprep.mubr.bf16.mxu0 0
    %1408 = vmatmul.mubr.bf16.gmra.mrb[0].mxu0 %v1312
    %v1409 = vpop.f32.mrb[0].mxu0
    %v1410 = vadd.f32 %v1325, %v1409
    %v1411 = vpop.f32.mrb[0].mxu0
    %v1412 = vpop.f32.mrb[0].mxu0
    %v1413 = vadd.f32 %v1325, %v1412
    %v1414 = vpop.f32.mrb[0].mxu0
    %1415 = vmatprep.mubr.bf16.mxu0 0
    %1416 = vmatmul.mubr.bf16.gmra.mrb[0].mxu0 %v1313
    %v1417 = vpop.f32.mrb[0].mxu0
    %v1418 = vadd.f32 %v1325, %v1417
    %v1419 = vpop.f32.mrb[0].mxu0
    %v1420 = vpop.f32.mrb[0].mxu0
    %v1421 = vadd.f32 %v1325, %v1420
    %v1422 = vpop.f32.mrb[0].mxu0
    %1423 = vmatprep.mubr.bf16.mxu0 0
    %1424 = vmatmul.mubr.bf16.gmra.mrb[0].mxu0 %v1314
    %v1425 = vpop.f32.mrb[0].mxu0
    %v1426 = vadd.f32 %v1325, %v1425
    %v1427 = vpop.f32.mrb[0].mxu0
    %v1428 = vpop.f32.mrb[0].mxu0
    %v1429 = vadd.f32 %v1325, %v1428
    %v1430 = vpop.f32.mrb[0].mxu0
    %1431 = vmatprep.mubr.bf16.mxu0 0
    %1432 = vmatmul.mubr.bf16.gmra.mrb[0].mxu0 %v1315
    %v1433 = vpop.f32.mrb[0].mxu0
    %v1434 = vadd.f32 %v1325, %v1433
    %v1435 = vpop.f32.mrb[0].mxu0
    %v1436 = vpop.f32.mrb[0].mxu0
    %v1437 = vadd.f32 %v1325, %v1436
    %v1438 = vpop.f32.mrb[0].mxu0
    %1439 = vmatprep.mubr.bf16.mxu0 0
    %1440 = vmatmul.mubr.bf16.gmra.mrb[0].mxu0 %v1316
    %v1441 = vpop.f32.mrb[0].mxu0
    %v1442 = vadd.f32 %v1325, %v1441
    %v1443 = vpop.f32.mrb[0].mxu0
    %v1444 = vpop.f32.mrb[0].mxu0
    %v1445 = vadd.f32 %v1325, %v1444
    %v1446 = vpop.f32.mrb[0].mxu0
    %1447 = vmatprep.mubr.bf16.mxu0 0
    %1448 = vmatmul.mubr.bf16.gmra.mrb[0].mxu0 %v1317
    %v1449 = vpop.f32.mrb[0].mxu0
    %v1450 = vadd.f32 %v1325, %v1449
    %v1451 = vpop.f32.mrb[0].mxu0
    %v1452 = vpop.f32.mrb[0].mxu0
    %v1453 = vadd.f32 %v1325, %v1452
    %v1454 = vpop.f32.mrb[0].mxu0
    %1455 = vmatprep.mubr.bf16.mxu0 0
    %1456 = vmatmul.mubr.bf16.gmra.mrb[0].mxu0 %v1318
    %v1457 = vpop.f32.mrb[0].mxu0
    %v1458 = vadd.f32 %v1325, %v1457
    %v1459 = vpop.f32.mrb[0].mxu0
    %v1460 = vpop.f32.mrb[0].mxu0
    %v1461 = vadd.f32 %v1325, %v1460
    %v1462 = vpop.f32.mrb[0].mxu0
    %1463 = vmatprep.mubr.bf16.mxu0 0
    %1464 = vmatmul.mubr.bf16.gmra.mrb[0].mxu0 %v1319
    %v1465 = vpop.f32.mrb[0].mxu0
    %v1466 = vadd.f32 %v1325, %v1465
    %v1467 = vpop.f32.mrb[0].mxu0
    %v1468 = vpop.f32.mrb[0].mxu0
    %v1469 = vadd.f32 %v1325, %v1468
    %v1470 = vpop.f32.mrb[0].mxu0
    %1471 = vdwg.mxu0
    %v1472 = vmax.f32 %v1410, 0.0
    %v1473 = vmax.f32 %v1413, 0.0
    %v1474 = vmax.f32 %v1418, 0.0
    %v1475 = vmax.f32 %v1421, 0.0
    %v1476 = vmax.f32 %v1426, 0.0
    %v1477 = vmax.f32 %v1429, 0.0
    %v1478 = vmax.f32 %v1434, 0.0
    %v1479 = vmax.f32 %v1437, 0.0
    %v1480 = vmax.f32 %v1442, 0.0
    %v1481 = vmax.f32 %v1445, 0.0
    %v1482 = vmax.f32 %v1450, 0.0
    %v1483 = vmax.f32 %v1453, 0.0
    %v1484 = vmax.f32 %v1458, 0.0
    %v1485 = vmax.f32 %v1461, 0.0
    %v1486 = vmax.f32 %v1466, 0.0
    %v1487 = vmax.f32 %v1469, 0.0
    %1488 = vst [vmem:[#allocation13] sm:$0xff] %v1472
    %1489 = vst [vmem:[#allocation13 + $0x8] sm:$0xff] %v1473
    %1490 = vst [vmem:[#allocation13 + $0x10] sm:$0xff] %v1474
    %1491 = vst [vmem:[#allocation13 + $0x18] sm:$0xff] %v1475
    %1492 = vst [vmem:[#allocation13 + $0x20] sm:$0xff] %v1476
    %1493 = vst [vmem:[#allocation13 + $0x28] sm:$0xff] %v1477
    %1494 = vst [vmem:[#allocation13 + $0x30] sm:$0xff] %v1478
    %1495 = vst [vmem:[#allocation13 + $0x38] sm:$0xff] %v1479
    %1496 = vst [vmem:[#allocation13 + $0x40] sm:$0xff] %v1480
    %1497 = vst [vmem:[#allocation13 + $0x48] sm:$0xff] %v1481
    %1498 = vst [vmem:[#allocation13 + $0x50] sm:$0xff] %v1482
    %1499 = vst [vmem:[#allocation13 + $0x58] sm:$0xff] %v1483
    %1500 = vst [vmem:[#allocation13 + $0x60] sm:$0xff] %v1484
    %1501 = vst [vmem:[#allocation13 + $0x68] sm:$0xff] %v1485
    %1502 = vst [vmem:[#allocation13 + $0x70] sm:$0xff] %v1486
    %1503 = vst [vmem:[#allocation13 + $0x78] sm:$0xff] %v1487
    // Predicated region
    $region54: #{tpu_custom_call.1} parent=1 // pred_check
      _
    $region55: #{tpu_custom_call.1} parent=1 // pred_check_branch
      %1505 = sbr.rel (0) target = $region57
    $region56: #{tpu_custom_call.1} parent=1 // pred_region
      %s1507 = ssub.s32 2048, 2048
      %1508 = vsyncadd [#allocation4], %s1507
      %s1509 = sshll.u32 [#allocation13], 4
      %s1510 = int_to_ptr.vmem [resolvable:$true] %s1509
      %1515 = dma.vmem_to_hbm [thread:$0]  %s1510, 2048, %s7, [#allocation4], 128, 128, 8
    $region57: #{tpu_custom_call.1} parent=1 // pred_fallthru
      _
    // Predicated region
    $region58: #{tpu_custom_call.1} parent=1 // pred_check
      _
    $region59: #{tpu_custom_call.1} parent=1 // pred_check_branch
      %1517 = sbr.rel (0) target = $region61
    $region60: #{tpu_custom_call.1} parent=1 // pred_region
      %1518 = dma.done [#allocation4], 2048
    $region61: #{tpu_custom_call.1} parent=1 // pred_fallthru
      _
    %1519 = vsyncpa [#allocation3], 1
    %1520 = vsyncpa [#allocation6], 1
    %1521 = vsyncpa [#allocation9], 1
    %1522 = vsyncpa [#allocation12], 1
    %1523 = vsyncpa [#allocation4], 1

</llo_original>
